<compile_context>
chip_gen: v6e
topology: v6e:2x2x1
jax: 0.10.0
libtpu: 0.0.40
codegen_flags: <defaults>
</compile_context>

<pallas_src>
import functools

import jax
import jax.numpy as jnp
from jax.experimental import pallas as pl
from jax.experimental.pallas import tpu as pltpu


def relu_conv1x3_kernel(x_ref, w_ref, o_ref, *, width):
    """x_ref: (RW, Cin)    channels-last rows, p = ((n*H + h)*W + w)
       w_ref: (3*Cin, Cout) im2col weights, tap-major rows
       o_ref: (RW, Cout)"""
    x = jnp.maximum(x_ref[...], 0.0)                     # fused ReLU (VPU)
    rw, cin = x.shape

    # width-position of every row, to realize the padding=(0,1) zero columns.
    wpos = jax.lax.broadcasted_iota(jnp.int32, (rw, cin), 0) % width

    # Shifted row copies (x[p-1], x[p+1]); rows that would read across the
    # padding boundary (including the roll wrap-around) are masked to zero,
    # which implements the (0,1) zero padding exactly (relu(0) == 0).
    x_prev = jnp.where(wpos == 0, 0.0, jnp.roll(x, 1, axis=0))
    x_next = jnp.where(wpos == width - 1, 0.0, jnp.roll(x, -1, axis=0))

    # im2col LHS: lane-aligned concat (Cin = 384 is a multiple of 128).
    lhs = jnp.concatenate([x_prev, x, x_next], axis=1)   # (RW, 3*Cin)

    # Single MXU matmul, K = 3*Cin = 1152, accumulate in f32.
    o_ref[...] = jnp.dot(
        lhs, w_ref[...], preferred_element_type=jnp.float32
    ).astype(o_ref.dtype)


def relu_conv2d_1x3(x_nchw, w_kcc):
    """x_nchw: (N, Cin, H, W) f32
       w_kcc:  (3, Cin, Cout) f32 with w_kcc[kw, ci, co] == torch_weight[co, ci, 0, kw]
       returns (N, Cout, H, W) f32 == F.conv2d(relu(x), W, padding=(0,1), bias=None)"""
    n, cin, h, w = x_nchw.shape
    k, _, cout = w_kcc.shape
    rw = n * h * w

    # NCHW -> (N*H*W, Cin). No zero-padding op here (handled in-kernel).
    x2d = jnp.transpose(x_nchw, (0, 2, 3, 1)).reshape(rw, cin)
    w2d = w_kcc.reshape(k * cin, cout)        # contiguous reshape, tap-major rows

    cost = pl.CostEstimate(
        flops=2 * rw * (k * cin) * cout,
        transcendentals=0,
        bytes_accessed=4 * (rw * cin + k * cin * cout + rw * cout),
    )

    out = pl.pallas_call(
        functools.partial(relu_conv1x3_kernel, width=w),
        out_shape=jax.ShapeDtypeStruct((rw, cout), x_nchw.dtype),
        grid_spec=pltpu.PrefetchScalarGridSpec(
            num_scalar_prefetch=0,
            # Whole problem is one tile at this size (25 rows). For a large
            # N*H*W, split rows over a leading "parallel" grid axis instead
            # (megacore / v7x second TensorCore).
            grid=(1,),
            in_specs=[
                pl.BlockSpec((rw, cin), lambda i: (0, 0)),
                pl.BlockSpec((k * cin, cout), lambda i: (0, 0)),
            ],
            out_specs=pl.BlockSpec((rw, cout), lambda i: (0, 0)),
        ),
        compiler_params=pltpu.CompilerParams(
            dimension_semantics=("arbitrary",)),
        cost_estimate=cost,
    )(x2d, w2d)

    # Lane-dense kernel output -> NCHW (only because the module API is NCHW).
    return jnp.transpose(out.reshape(n, h, w, cout), (0, 3, 1, 2))


if __name__ == "__main__":
    key = jax.random.PRNGKey(0)
    kx, kw_key = jax.random.split(key)

    N, Cin, Cout, H, W = 1, 384, 384, 5, 5
    x = jax.random.normal(kx, (N, Cin, H, W), dtype=jnp.float32)
    # Deterministic weights; torch layout would be (Cout, Cin, 1, 3); we store
    # the equivalent (kw, Cin, Cout) directly.
    w = jax.random.normal(kw_key, (3, Cin, Cout), dtype=jnp.float32) * 0.02

    y = jax.block_until_ready(relu_conv2d_1x3(x, w))

    # Reference: XLA conv on relu(x) with OIHW weights (Cout, Cin, 1, 3).
    w_oihw = jnp.transpose(w, (2, 1, 0))[:, :, None, :]
    y_ref = jax.lax.conv_general_dilated(
        jnp.maximum(x, 0.0), w_oihw,
        window_strides=(1, 1), padding=((0, 0), (1, 1)),
        dimension_numbers=("NCHW", "OIHW", "NCHW"))

    assert y.shape == (N, Cout, H, W)
    assert jnp.allclose(y, y_ref, atol=2e-4, rtol=2e-4), (
        float(jnp.max(jnp.abs(y - y_ref))))

    print("KERNEL_OK")
</pallas_src>

<mosaic_0001>
module attributes {stable_mosaic.version = 11 : i64} {
  func.func @relu_conv1x3_kernel(%arg0: i32, %arg1: memref<25x384xf32, #tpu.memory_space<vmem>>, %arg2: memref<1152x384xf32, #tpu.memory_space<vmem>>, %arg3: memref<25x384xf32, #tpu.memory_space<vmem>>) attributes {dimension_semantics = [#tpu.dimension_semantics<arbitrary>], iteration_bounds = array<i64: 1>, scalar_prefetch = 0 : i64, scratch_operands = 0 : i64, tpu.core_type = #tpu.core_type<tc>, window_params = [{pipeline_mode = #tpu.pipeline_mode<synchronous>, transform_indices = @transform_0, window_bounds = array<i64: 25, 384>}, {pipeline_mode = #tpu.pipeline_mode<synchronous>, transform_indices = @transform_1, window_bounds = array<i64: 1152, 384>}, {pipeline_mode = #tpu.pipeline_mode<synchronous>, transform_indices = @transform_2, window_bounds = array<i64: 25, 384>}]} {
    %c0 = arith.constant 0 : index
    %c0_0 = arith.constant 0 : index
    %0 = vector.load %arg1[%c0, %c0_0] : memref<25x384xf32, #tpu.memory_space<vmem>>, vector<25x384xf32>
    %cst = arith.constant 0.000000e+00 : f32
    %1 = vector.broadcast %cst : f32 to vector<25x384xf32>
    %2 = arith.maximumf %0, %1 : vector<25x384xf32>
    %3 = tpu.iota {dimensions = array<i32: 0>} : vector<25x384xi32>
    %c5_i32 = arith.constant 5 : i32
    %c0_i32 = arith.constant 0 : i32
    %4 = arith.cmpi eq, %c5_i32, %c0_i32 : i32
    %c1_i32 = arith.constant 1 : i32
    %5 = arith.select %4, %c1_i32, %c5_i32 : i32
    %6 = vector.broadcast %5 : i32 to vector<25x384xi32>
    %7 = arith.remsi %3, %6 : vector<25x384xi32>
    %c0_i32_1 = arith.constant 0 : i32
    %8 = vector.broadcast %c0_i32_1 : i32 to vector<25x384xi32>
    %9 = arith.cmpi ne, %7, %8 : vector<25x384xi32>
    %c0_i32_2 = arith.constant 0 : i32
    %10 = vector.broadcast %c0_i32_2 : i32 to vector<25x384xi32>
    %11 = arith.cmpi slt, %7, %10 : vector<25x384xi32>
    %c0_i32_3 = arith.constant 0 : i32
    %12 = arith.cmpi slt, %5, %c0_i32_3 : i32
    %13 = vector.broadcast %12 : i1 to vector<25x384xi1>
    %14 = vector.broadcast %13 : vector<25x384xi1> to vector<25x384xi1>
    %15 = arith.xori %11, %14 : vector<25x384xi1>
    %16 = arith.andi %15, %9 : vector<25x384xi1>
    %17 = vector.broadcast %5 : i32 to vector<25x384xi32>
    %18 = arith.addi %7, %17 : vector<25x384xi32>
    %19 = arith.select %16, %18, %7 : vector<25x384xi1>, vector<25x384xi32>
    %c0_i32_4 = arith.constant 0 : i32
    %20 = vector.broadcast %c0_i32_4 : i32 to vector<25x384xi32>
    %21 = arith.cmpi eq, %19, %20 : vector<25x384xi32>
    %22 = vector.extract_strided_slice %2 {offsets = [24, 0], sizes = [1, 384], strides = [1, 1]} : vector<25x384xf32> to vector<1x384xf32>
    %23 = vector.extract_strided_slice %2 {offsets = [0, 0], sizes = [24, 384], strides = [1, 1]} : vector<25x384xf32> to vector<24x384xf32>
    %24 = tpu.concatenate %22, %23 in 0 : vector<1x384xf32>, vector<24x384xf32> -> vector<25x384xf32>
    %cst_5 = arith.constant 0.000000e+00 : f32
    %25 = vector.broadcast %cst_5 : f32 to vector<25x384xf32>
    %26 = arith.select %21, %25, %24 : vector<25x384xi1>, vector<25x384xf32>
    %c4_i32 = arith.constant 4 : i32
    %27 = vector.broadcast %c4_i32 : i32 to vector<25x384xi32>
    %28 = arith.cmpi eq, %19, %27 : vector<25x384xi32>
    %29 = vector.extract_strided_slice %2 {offsets = [1, 0], sizes = [24, 384], strides = [1, 1]} : vector<25x384xf32> to vector<24x384xf32>
    %30 = vector.extract_strided_slice %2 {offsets = [0, 0], sizes = [1, 384], strides = [1, 1]} : vector<25x384xf32> to vector<1x384xf32>
    %31 = tpu.concatenate %29, %30 in 0 : vector<24x384xf32>, vector<1x384xf32> -> vector<25x384xf32>
    %cst_6 = arith.constant 0.000000e+00 : f32
    %32 = vector.broadcast %cst_6 : f32 to vector<25x384xf32>
    %33 = arith.select %28, %32, %31 : vector<25x384xi1>, vector<25x384xf32>
    %34 = tpu.concatenate %26, %2, %33 in 1 : vector<25x384xf32>, vector<25x384xf32>, vector<25x384xf32> -> vector<25x1152xf32>
    %c0_7 = arith.constant 0 : index
    %c0_8 = arith.constant 0 : index
    %35 = vector.load %arg2[%c0_7, %c0_8] : memref<1152x384xf32, #tpu.memory_space<vmem>>, vector<1152x384xf32>
    %cst_9 = arith.constant dense<0.000000e+00> : vector<25x384xf32>
    %36 = tpu.matmul %34, %35, %cst_9 {dimension_numbers = #tpu.dot_dimension_numbers<[1], [0], [0], [1], [0, 0, 1, 1], [], []>} : vector<25x1152xf32>, vector<1152x384xf32>, vector<25x384xf32> -> vector<25x384xf32>
    %c0_10 = arith.constant 0 : index
    %c0_11 = arith.constant 0 : index
    %37 = vector.load %arg3[%c0_10, %c0_11] : memref<25x384xf32, #tpu.memory_space<vmem>>, vector<25x384xf32>
    tpu.vector_store %arg3[%c0_10, %c0_11], %36 {strides = array<i32>} : memref<25x384xf32, #tpu.memory_space<vmem>>, vector<25x384xf32>,
    return
  }
  func.func @transform_0(%arg0: i32) -> (i32, i32) {
    %c0_i32 = arith.constant 0 : i32
    %c0_i32_0 = arith.constant 0 : i32
    %c0_i32_1 = arith.constant 0 : i32
    return %c0_i32, %c0_i32_0 : i32, i32
  }
  func.func @transform_1(%arg0: i32) -> (i32, i32) {
    %c0_i32 = arith.constant 0 : i32
    %c0_i32_0 = arith.constant 0 : i32
    %c0_i32_1 = arith.constant 0 : i32
    return %c0_i32, %c0_i32_0 : i32, i32
  }
  func.func @transform_2(%arg0: i32) -> (i32, i32) {
    %c0_i32 = arith.constant 0 : i32
    %c0_i32_0 = arith.constant 0 : i32
    %c0_i32_1 = arith.constant 0 : i32
    return %c0_i32, %c0_i32_0 : i32, i32
  }
}

</mosaic_0001>

<llo_original>
// kernel: tpu_custom_call.1
$region0: #{tpu_custom_call.1}
  #allocation0 [shape = 'u32[]', space=smem, size = 0x4, offset = 0x4, fixed_abs, tag = 'smem constant byte address 0x4 - core index']
  #allocation1 [shape = 'u32[144,128]{1,0:T(1,128)}', space=vmem, size = 0x12000, scoped, tag = 'internal scratch']
  %s0 = inlined_call_operand.hbm [shape: f32[25,384], index: 0, kind: input, shape index: {}]
  %s1 = inlined_call_operand.hbm [shape: f32[1152,384], index: 1, kind: input, shape index: {}]
  %s2 = inlined_call_operand.hbm [shape: f32[25,384], index: 2, kind: output, shape index: {}]
  %s3 = sld [smem:[#allocation0]]
  $region26: #{tpu_custom_call.1} parent=0
    _
  %s5 = ssub.s32 1, %s3
  %s6 = scalar_select 0, %s5, %s3
  $region1: #{tpu_custom_call.1} parent=0
    #allocation2 [shape = 'u8[49152]{0}', space=vmem, size = 0xc000, scoped, tag = 'input window, operand 0, single buffered']
    #allocation3 [shape = 's32[1]{0}', space=sflag, size = 0x4, scoped, tag = 'scoped memory for tpu_custom_call.1']
    #allocation4 [shape = 's32[1]{0}', space=sflag, size = 0x4, scoped, tag = 'scoped memory for tpu_custom_call.1']
    #allocation5 [shape = 'u8[1769472]{0}', space=vmem, size = 0x1b0000, scoped, tag = 'input window, operand 1, single buffered']
    #allocation6 [shape = 's32[1]{0}', space=sflag, size = 0x4, scoped, tag = 'scoped memory for tpu_custom_call.1']
    #allocation7 [shape = 'u8[49152]{0}', space=vmem, size = 0xc000, scoped, tag = 'output window, operand 0, single buffered']
    %7 = vsyncpa [#allocation3], 0
    %8 = vsyncpa [#allocation6], 0
    %9 = vsyncpa [#allocation4], 0
    // Predicated region
    $region2: #{tpu_custom_call.1} parent=1 // pred_check
      _
    $region3: #{tpu_custom_call.1} parent=1 // pred_check_branch
      %11 = sbr.rel (0) target = $region5
    $region4: #{tpu_custom_call.1} parent=1 // pred_region
      %s13 = ssub.s32 1536, 1536
      %14 = vsyncadd [#allocation3], %s13
      %s15 = sshll.u32 [#allocation2], 4
      %s16 = int_to_ptr.vmem [resolvable:$true] %s15
      %21 = dma.hbm_to_vmem [thread:$0]  %s0, 1536, %s16, [#allocation3], 384, 384, 24
    $region5: #{tpu_custom_call.1} parent=1 // pred_fallthru
      _
    // Predicated region
    $region6: #{tpu_custom_call.1} parent=1 // pred_check
      _
    $region7: #{tpu_custom_call.1} parent=1 // pred_check_branch
      %23 = sbr.rel (0) target = $region9
    $region8: #{tpu_custom_call.1} parent=1 // pred_region
      %s25 = ssub.s32 55296, 55296
      %26 = vsyncadd [#allocation6], %s25
      %s27 = sshll.u32 [#allocation5], 4
      %s28 = int_to_ptr.vmem [resolvable:$true] %s27
      %33 = dma.hbm_to_vmem [thread:$0]  %s1, 55296, %s28, [#allocation6], 384, 384, 24
    $region9: #{tpu_custom_call.1} parent=1 // pred_fallthru
      _
    // Predicated region
    $region10: #{tpu_custom_call.1} parent=1 // pred_check
      _
    $region11: #{tpu_custom_call.1} parent=1 // pred_check_branch
      %35 = sbr.rel (0) target = $region13
    $region12: #{tpu_custom_call.1} parent=1 // pred_region
      %36 = dma.done [#allocation3], 1536
    $region13: #{tpu_custom_call.1} parent=1 // pred_fallthru
      _
    // Predicated region
    $region14: #{tpu_custom_call.1} parent=1 // pred_check
      _
    $region15: #{tpu_custom_call.1} parent=1 // pred_check_branch
      %38 = sbr.rel (0) target = $region17
    $region16: #{tpu_custom_call.1} parent=1 // pred_region
      %39 = dma.done [#allocation6], 55296
    $region17: #{tpu_custom_call.1} parent=1 // pred_fallthru
      _
    %v40 = vld [vmem:[#allocation2] sm:$0xff]
    %v41 = vld [vmem:[#allocation2 + $0x8] sm:$0xff]
    %v42 = vld [vmem:[#allocation2 + $0x10] sm:$0xff]
    %v43 = vld [vmem:[#allocation2 + $0x18] sm:$0xff]
    %v44 = vld [vmem:[#allocation2 + $0x20] sm:$0xff]
    %v45 = vld [vmem:[#allocation2 + $0x28] sm:$0xff]
    %v46 = vld [vmem:[#allocation2 + $0x30] sm:$0xff]
    %v47 = vld [vmem:[#allocation2 + $0x38] sm:$0xff]
    %v48 = vld [vmem:[#allocation2 + $0x40] sm:$0xff]
    %v49 = vld [vmem:[#allocation2 + $0x48] sm:$0x1]
    %v50 = vld [vmem:[#allocation2 + $0x50] sm:$0x1]
    %v51 = vld [vmem:[#allocation2 + $0x58] sm:$0x1]
    %v52 = vmax.f32 %v40, 0.0
    %v53 = vmax.f32 %v41, 0.0
    %v54 = vmax.f32 %v42, 0.0
    %v55 = vmax.f32 %v43, 0.0
    %v56 = vmax.f32 %v44, 0.0
    %v57 = vmax.f32 %v45, 0.0
    %v58 = vmax.f32 %v46, 0.0
    %v59 = vmax.f32 %v47, 0.0
    %v60 = vmax.f32 %v48, 0.0
    %v61 = vmax.f32 %v49, 0.0
    %v62 = vmax.f32 %v50, 0.0
    %v63 = vmax.f32 %v51, 0.0
    %v64 = vlaneseq
    %v65 = vshrl.u32 %v64, 7
    %v66 = vadd.s32 %v65, 8
    %v67 = vadd.s32 %v65, 16
    %v68 = vadd.s32 %v65, 24
    %vm69 = vcmp.lt.s32.totalorder %v65, 0
    %v70 = vsub.s32 0, %v65
    %v71 = vsel %vm69, %v70, %v65
    %v72 = vmul.u32.u64.compose %v71, 3435973837
    %v73 = vextract.low.u32 %v72
    %v74 = vextract.high.u32 %v72
    %v75 = vshrl.u32 %v74, 2
    %v76 = vmul.u32 %v75, 5
    %v77 = vsub.s32 %v71, %v76
    %v78 = vsub.s32 0, %v77
    %v79 = vsel %vm69, %v78, %v77
    %vm80 = vcmp.lt.s32.totalorder %v66, 0
    %v81 = vsub.s32 0, %v66
    %v82 = vsel %vm80, %v81, %v66
    %v83 = vmul.u32.u64.compose %v82, 3435973837
    %v84 = vextract.low.u32 %v83
    %v85 = vextract.high.u32 %v83
    %v86 = vshrl.u32 %v85, 2
    %v87 = vmul.u32 %v86, 5
    %v88 = vsub.s32 %v82, %v87
    %v89 = vsub.s32 0, %v88
    %v90 = vsel %vm80, %v89, %v88
    %vm91 = vcmp.lt.s32.totalorder %v67, 0
    %v92 = vsub.s32 0, %v67
    %v93 = vsel %vm91, %v92, %v67
    %v94 = vmul.u32.u64.compose %v93, 3435973837
    %v95 = vextract.low.u32 %v94
    %v96 = vextract.high.u32 %v94
    %v97 = vshrl.u32 %v96, 2
    %v98 = vmul.u32 %v97, 5
    %v99 = vsub.s32 %v93, %v98
    %v100 = vsub.s32 0, %v99
    %v101 = vsel %vm91, %v100, %v99
    %vm102 = vcmp.lt.s32.totalorder %v68, 0
    %v103 = vsub.s32 0, %v68
    %v104 = vsel %vm102, %v103, %v68
    %v105 = vmul.u32.u64.compose %v104, 3435973837
    %v106 = vextract.low.u32 %v105
    %v107 = vextract.high.u32 %v105
    %v108 = vshrl.u32 %v107, 2
    %v109 = vmul.u32 %v108, 5
    %v110 = vsub.s32 %v104, %v109
    %v111 = vsub.s32 0, %v110
    %v112 = vsel %vm102, %v111, %v110
    %vm113 = vcmp.ne.s32.totalorder %v79, 0
    %vm114 = vcmp.ne.s32.totalorder %v90, 0
    %vm115 = vcmp.ne.s32.totalorder %v101, 0
    %vm116 = vcmp.ne.s32.totalorder %v112, 0
    %vm117 = vcmp.lt.s32.totalorder %v79, 0
    %vm118 = vcmp.lt.s32.totalorder %v90, 0
    %vm119 = vcmp.lt.s32.totalorder %v101, 0
    %vm120 = vcmp.lt.s32.totalorder %v112, 0
    %vm121 = vmand %vm117, %vm113
    %vm122 = vmand %vm118, %vm114
    %vm123 = vmand %vm119, %vm115
    %vm124 = vmand %vm120, %vm116
    %v125 = vadd.s32 %v79, 5
    %v126 = vadd.s32 %v90, 5
    %v127 = vadd.s32 %v101, 5
    %v128 = vadd.s32 %v112, 5
    %v129 = vsel %vm121, %v125, %v79
    %v130 = vsel %vm122, %v126, %v90
    %v131 = vsel %vm123, %v127, %v101
    %v132 = vsel %vm124, %v128, %v112
    %vm133 = vcmp.eq.s32.totalorder %v129, 0
    %vm134 = vcmp.eq.s32.totalorder %v130, 0
    %vm135 = vcmp.eq.s32.totalorder %v131, 0
    %vm136 = vcmp.eq.s32.totalorder %v132, 0
    %vm146 = vcmask 1040384
    %v147 = vrot.slane %v52, 7
    %v148 = vrot.slane %v53, 7
    %v149 = vrot.slane %v54, 7
    %v150 = vrot.slane %v55, 7
    %v151 = vsel %vm146, %v147, %v150
    %v152 = vrot.slane %v56, 7
    %v153 = vsel %vm146, %v148, %v152
    %v154 = vrot.slane %v57, 7
    %v155 = vsel %vm146, %v149, %v154
    %v156 = vrot.slane %v58, 7
    %v157 = vsel %vm146, %v150, %v156
    %v158 = vrot.slane %v59, 7
    %v159 = vsel %vm146, %v152, %v158
    %v160 = vrot.slane %v60, 7
    %v161 = vsel %vm146, %v154, %v160
    %v174 = vsel %vm146, %v61, %v147
    %v175 = vsel %vm146, %v62, %v148
    %v176 = vsel %vm146, %v63, %v149
    %v177 = vsel %vm133, 0.0, %v174
    %v178 = vsel %vm133, 0.0, %v175
    %v179 = vsel %vm133, 0.0, %v176
    %v180 = vsel %vm134, 0.0, %v151
    %v181 = vsel %vm134, 0.0, %v153
    %v182 = vsel %vm134, 0.0, %v155
    %v183 = vsel %vm135, 0.0, %v157
    %v184 = vsel %vm135, 0.0, %v159
    %v185 = vsel %vm135, 0.0, %v161
    %v186 = vsel %vm136, 0.0, %v156
    %v187 = vsel %vm136, 0.0, %v158
    %v188 = vsel %vm136, 0.0, %v160
    %vm189 = vcmp.eq.s32.totalorder %v129, 4
    %vm190 = vcmp.eq.s32.totalorder %v130, 4
    %vm191 = vcmp.eq.s32.totalorder %v131, 4
    %vm192 = vcmp.eq.s32.totalorder %v132, 4
    %vm196 = vcmask 1046528
    %v197 = vrot.slane %v52, 1
    %v198 = vrot.slane %v55, 1
    %v199 = vsel %vm196, %v197, %v198
    %v200 = vrot.slane %v53, 1
    %v201 = vrot.slane %v56, 1
    %v202 = vsel %vm196, %v200, %v201
    %v203 = vrot.slane %v54, 1
    %v204 = vrot.slane %v57, 1
    %v205 = vsel %vm196, %v203, %v204
    %v206 = vrot.slane %v58, 1
    %v207 = vsel %vm196, %v198, %v206
    %v208 = vrot.slane %v59, 1
    %v209 = vsel %vm196, %v201, %v208
    %v210 = vrot.slane %v60, 1
    %v211 = vsel %vm196, %v204, %v210
    %v212 = vrot.slane %v61, 1
    %v213 = vsel %vm196, %v206, %v212
    %v214 = vrot.slane %v62, 1
    %v215 = vsel %vm196, %v208, %v214
    %v216 = vrot.slane %v63, 1
    %v217 = vsel %vm196, %v210, %v216
    %v227 = vsel %vm189, 0.0, %v199
    %v228 = vsel %vm189, 0.0, %v202
    %v229 = vsel %vm189, 0.0, %v205
    %v230 = vsel %vm190, 0.0, %v207
    %v231 = vsel %vm190, 0.0, %v209
    %v232 = vsel %vm190, 0.0, %v211
    %v233 = vsel %vm191, 0.0, %v213
    %v234 = vsel %vm191, 0.0, %v215
    %v235 = vsel %vm191, 0.0, %v217
    %v236 = vsel %vm192, 0.0, %v52
    %v237 = vsel %vm192, 0.0, %v53
    %v238 = vsel %vm192, 0.0, %v54
    %v239 = vld [vmem:[#allocation5] sm:$0xff]
    %v240 = vld [vmem:[#allocation5 + $0x8] sm:$0xff]
    %v241 = vld [vmem:[#allocation5 + $0x10] sm:$0xff]
    %v242 = vld [vmem:[#allocation5 + $0x18] sm:$0xff]
    %v243 = vld [vmem:[#allocation5 + $0x20] sm:$0xff]
    %v244 = vld [vmem:[#allocation5 + $0x28] sm:$0xff]
    %v245 = vld [vmem:[#allocation5 + $0x30] sm:$0xff]
    %v246 = vld [vmem:[#allocation5 + $0x38] sm:$0xff]
    %v247 = vld [vmem:[#allocation5 + $0x40] sm:$0xff]
    %v248 = vld [vmem:[#allocation5 + $0x48] sm:$0xff]
    %v249 = vld [vmem:[#allocation5 + $0x50] sm:$0xff]
    %v250 = vld [vmem:[#allocation5 + $0x58] sm:$0xff]
    %v251 = vld [vmem:[#allocation5 + $0x60] sm:$0xff]
    %v252 = vld [vmem:[#allocation5 + $0x68] sm:$0xff]
    %v253 = vld [vmem:[#allocation5 + $0x70] sm:$0xff]
    %v254 = vld [vmem:[#allocation5 + $0x78] sm:$0xff]
    %v255 = vld [vmem:[#allocation5 + $0x80] sm:$0xff]
    %v256 = vld [vmem:[#allocation5 + $0x88] sm:$0xff]
    %v257 = vld [vmem:[#allocation5 + $0x90] sm:$0xff]
    %v258 = vld [vmem:[#allocation5 + $0x98] sm:$0xff]
    %v259 = vld [vmem:[#allocation5 + $0xa0] sm:$0xff]
    %v260 = vld [vmem:[#allocation5 + $0xa8] sm:$0xff]
    %v261 = vld [vmem:[#allocation5 + $0xb0] sm:$0xff]
    %v262 = vld [vmem:[#allocation5 + $0xb8] sm:$0xff]
    %v263 = vld [vmem:[#allocation5 + $0xc0] sm:$0xff]
    %v264 = vld [vmem:[#allocation5 + $0xc8] sm:$0xff]
    %v265 = vld [vmem:[#allocation5 + $0xd0] sm:$0xff]
    %v266 = vld [vmem:[#allocation5 + $0xd8] sm:$0xff]
    %v267 = vld [vmem:[#allocation5 + $0xe0] sm:$0xff]
    %v268 = vld [vmem:[#allocation5 + $0xe8] sm:$0xff]
    %v269 = vld [vmem:[#allocation5 + $0xf0] sm:$0xff]
    %v270 = vld [vmem:[#allocation5 + $0xf8] sm:$0xff]
    %v271 = vld [vmem:[#allocation5 + $0x100] sm:$0xff]
    %v272 = vld [vmem:[#allocation5 + $0x108] sm:$0xff]
    %v273 = vld [vmem:[#allocation5 + $0x110] sm:$0xff]
    %v274 = vld [vmem:[#allocation5 + $0x118] sm:$0xff]
    %v275 = vld [vmem:[#allocation5 + $0x120] sm:$0xff]
    %v276 = vld [vmem:[#allocation5 + $0x128] sm:$0xff]
    %v277 = vld [vmem:[#allocation5 + $0x130] sm:$0xff]
    %v278 = vld [vmem:[#allocation5 + $0x138] sm:$0xff]
    %v279 = vld [vmem:[#allocation5 + $0x140] sm:$0xff]
    %v280 = vld [vmem:[#allocation5 + $0x148] sm:$0xff]
    %v281 = vld [vmem:[#allocation5 + $0x150] sm:$0xff]
    %v282 = vld [vmem:[#allocation5 + $0x158] sm:$0xff]
    %v283 = vld [vmem:[#allocation5 + $0x160] sm:$0xff]
    %v284 = vld [vmem:[#allocation5 + $0x168] sm:$0xff]
    %v285 = vld [vmem:[#allocation5 + $0x170] sm:$0xff]
    %v286 = vld [vmem:[#allocation5 + $0x178] sm:$0xff]
    %v287 = vld [vmem:[#allocation5 + $0x180] sm:$0xff]
    %v288 = vld [vmem:[#allocation5 + $0x188] sm:$0xff]
    %v289 = vld [vmem:[#allocation5 + $0x190] sm:$0xff]
    %v290 = vld [vmem:[#allocation5 + $0x198] sm:$0xff]
    %v291 = vld [vmem:[#allocation5 + $0x1a0] sm:$0xff]
    %v292 = vld [vmem:[#allocation5 + $0x1a8] sm:$0xff]
    %v293 = vld [vmem:[#allocation5 + $0x1b0] sm:$0xff]
    %v294 = vld [vmem:[#allocation5 + $0x1b8] sm:$0xff]
    %v295 = vld [vmem:[#allocation5 + $0x1c0] sm:$0xff]
    %v296 = vld [vmem:[#allocation5 + $0x1c8] sm:$0xff]
    %v297 = vld [vmem:[#allocation5 + $0x1d0] sm:$0xff]
    %v298 = vld [vmem:[#allocation5 + $0x1d8] sm:$0xff]
    %v299 = vld [vmem:[#allocation5 + $0x1e0] sm:$0xff]
    %v300 = vld [vmem:[#allocation5 + $0x1e8] sm:$0xff]
    %v301 = vld [vmem:[#allocation5 + $0x1f0] sm:$0xff]
    %v302 = vld [vmem:[#allocation5 + $0x1f8] sm:$0xff]
    %v303 = vld [vmem:[#allocation5 + $0x200] sm:$0xff]
    %v304 = vld [vmem:[#allocation5 + $0x208] sm:$0xff]
    %v305 = vld [vmem:[#allocation5 + $0x210] sm:$0xff]
    %v306 = vld [vmem:[#allocation5 + $0x218] sm:$0xff]
    %v307 = vld [vmem:[#allocation5 + $0x220] sm:$0xff]
    %v308 = vld [vmem:[#allocation5 + $0x228] sm:$0xff]
    %v309 = vld [vmem:[#allocation5 + $0x230] sm:$0xff]
    %v310 = vld [vmem:[#allocation5 + $0x238] sm:$0xff]
    %v311 = vld [vmem:[#allocation5 + $0x240] sm:$0xff]
    %v312 = vld [vmem:[#allocation5 + $0x248] sm:$0xff]
    %v313 = vld [vmem:[#allocation5 + $0x250] sm:$0xff]
    %v314 = vld [vmem:[#allocation5 + $0x258] sm:$0xff]
    %v315 = vld [vmem:[#allocation5 + $0x260] sm:$0xff]
    %v316 = vld [vmem:[#allocation5 + $0x268] sm:$0xff]
    %v317 = vld [vmem:[#allocation5 + $0x270] sm:$0xff]
    %v318 = vld [vmem:[#allocation5 + $0x278] sm:$0xff]
    %v319 = vld [vmem:[#allocation5 + $0x280] sm:$0xff]
    %v320 = vld [vmem:[#allocation5 + $0x288] sm:$0xff]
    %v321 = vld [vmem:[#allocation5 + $0x290] sm:$0xff]
    %v322 = vld [vmem:[#allocation5 + $0x298] sm:$0xff]
    %v323 = vld [vmem:[#allocation5 + $0x2a0] sm:$0xff]
    %v324 = vld [vmem:[#allocation5 + $0x2a8] sm:$0xff]
    %v325 = vld [vmem:[#allocation5 + $0x2b0] sm:$0xff]
    %v326 = vld [vmem:[#allocation5 + $0x2b8] sm:$0xff]
    %v327 = vld [vmem:[#allocation5 + $0x2c0] sm:$0xff]
    %v328 = vld [vmem:[#allocation5 + $0x2c8] sm:$0xff]
    %v329 = vld [vmem:[#allocation5 + $0x2d0] sm:$0xff]
    %v330 = vld [vmem:[#allocation5 + $0x2d8] sm:$0xff]
    %v331 = vld [vmem:[#allocation5 + $0x2e0] sm:$0xff]
    %v332 = vld [vmem:[#allocation5 + $0x2e8] sm:$0xff]
    %v333 = vld [vmem:[#allocation5 + $0x2f0] sm:$0xff]
    %v334 = vld [vmem:[#allocation5 + $0x2f8] sm:$0xff]
    %v335 = vld [vmem:[#allocation5 + $0x300] sm:$0xff]
    %v336 = vld [vmem:[#allocation5 + $0x308] sm:$0xff]
    %v337 = vld [vmem:[#allocation5 + $0x310] sm:$0xff]
    %v338 = vld [vmem:[#allocation5 + $0x318] sm:$0xff]
    %v339 = vld [vmem:[#allocation5 + $0x320] sm:$0xff]
    %v340 = vld [vmem:[#allocation5 + $0x328] sm:$0xff]
    %v341 = vld [vmem:[#allocation5 + $0x330] sm:$0xff]
    %v342 = vld [vmem:[#allocation5 + $0x338] sm:$0xff]
    %v343 = vld [vmem:[#allocation5 + $0x340] sm:$0xff]
    %v344 = vld [vmem:[#allocation5 + $0x348] sm:$0xff]
    %v345 = vld [vmem:[#allocation5 + $0x350] sm:$0xff]
    %v346 = vld [vmem:[#allocation5 + $0x358] sm:$0xff]
    %v347 = vld [vmem:[#allocation5 + $0x360] sm:$0xff]
    %v348 = vld [vmem:[#allocation5 + $0x368] sm:$0xff]
    %v349 = vld [vmem:[#allocation5 + $0x370] sm:$0xff]
    %v350 = vld [vmem:[#allocation5 + $0x378] sm:$0xff]
    %v351 = vld [vmem:[#allocation5 + $0x380] sm:$0xff]
    %v352 = vld [vmem:[#allocation5 + $0x388] sm:$0xff]
    %v353 = vld [vmem:[#allocation5 + $0x390] sm:$0xff]
    %v354 = vld [vmem:[#allocation5 + $0x398] sm:$0xff]
    %v355 = vld [vmem:[#allocation5 + $0x3a0] sm:$0xff]
    %v356 = vld [vmem:[#allocation5 + $0x3a8] sm:$0xff]
    %v357 = vld [vmem:[#allocation5 + $0x3b0] sm:$0xff]
    %v358 = vld [vmem:[#allocation5 + $0x3b8] sm:$0xff]
    %v359 = vld [vmem:[#allocation5 + $0x3c0] sm:$0xff]
    %v360 = vld [vmem:[#allocation5 + $0x3c8] sm:$0xff]
    %v361 = vld [vmem:[#allocation5 + $0x3d0] sm:$0xff]
    %v362 = vld [vmem:[#allocation5 + $0x3d8] sm:$0xff]
    %v363 = vld [vmem:[#allocation5 + $0x3e0] sm:$0xff]
    %v364 = vld [vmem:[#allocation5 + $0x3e8] sm:$0xff]
    %v365 = vld [vmem:[#allocation5 + $0x3f0] sm:$0xff]
    %v366 = vld [vmem:[#allocation5 + $0x3f8] sm:$0xff]
    %v367 = vld [vmem:[#allocation5 + $0x400] sm:$0xff]
    %v368 = vld [vmem:[#allocation5 + $0x408] sm:$0xff]
    %v369 = vld [vmem:[#allocation5 + $0x410] sm:$0xff]
    %v370 = vld [vmem:[#allocation5 + $0x418] sm:$0xff]
    %v371 = vld [vmem:[#allocation5 + $0x420] sm:$0xff]
    %v372 = vld [vmem:[#allocation5 + $0x428] sm:$0xff]
    %v373 = vld [vmem:[#allocation5 + $0x430] sm:$0xff]
    %v374 = vld [vmem:[#allocation5 + $0x438] sm:$0xff]
    %v375 = vld [vmem:[#allocation5 + $0x440] sm:$0xff]
    %v376 = vld [vmem:[#allocation5 + $0x448] sm:$0xff]
    %v377 = vld [vmem:[#allocation5 + $0x450] sm:$0xff]
    %v378 = vld [vmem:[#allocation5 + $0x458] sm:$0xff]
    %v379 = vld [vmem:[#allocation5 + $0x460] sm:$0xff]
    %v380 = vld [vmem:[#allocation5 + $0x468] sm:$0xff]
    %v381 = vld [vmem:[#allocation5 + $0x470] sm:$0xff]
    %v382 = vld [vmem:[#allocation5 + $0x478] sm:$0xff]
    %v383 = vld [vmem:[#allocation5 + $0x480] sm:$0xff]
    %v384 = vld [vmem:[#allocation5 + $0x488] sm:$0xff]
    %v385 = vld [vmem:[#allocation5 + $0x490] sm:$0xff]
    %v386 = vld [vmem:[#allocation5 + $0x498] sm:$0xff]
    %v387 = vld [vmem:[#allocation5 + $0x4a0] sm:$0xff]
    %v388 = vld [vmem:[#allocation5 + $0x4a8] sm:$0xff]
    %v389 = vld [vmem:[#allocation5 + $0x4b0] sm:$0xff]
    %v390 = vld [vmem:[#allocation5 + $0x4b8] sm:$0xff]
    %v391 = vld [vmem:[#allocation5 + $0x4c0] sm:$0xff]
    %v392 = vld [vmem:[#allocation5 + $0x4c8] sm:$0xff]
    %v393 = vld [vmem:[#allocation5 + $0x4d0] sm:$0xff]
    %v394 = vld [vmem:[#allocation5 + $0x4d8] sm:$0xff]
    %v395 = vld [vmem:[#allocation5 + $0x4e0] sm:$0xff]
    %v396 = vld [vmem:[#allocation5 + $0x4e8] sm:$0xff]
    %v397 = vld [vmem:[#allocation5 + $0x4f0] sm:$0xff]
    %v398 = vld [vmem:[#allocation5 + $0x4f8] sm:$0xff]
    %v399 = vld [vmem:[#allocation5 + $0x500] sm:$0xff]
    %v400 = vld [vmem:[#allocation5 + $0x508] sm:$0xff]
    %v401 = vld [vmem:[#allocation5 + $0x510] sm:$0xff]
    %v402 = vld [vmem:[#allocation5 + $0x518] sm:$0xff]
    %v403 = vld [vmem:[#allocation5 + $0x520] sm:$0xff]
    %v404 = vld [vmem:[#allocation5 + $0x528] sm:$0xff]
    %v405 = vld [vmem:[#allocation5 + $0x530] sm:$0xff]
    %v406 = vld [vmem:[#allocation5 + $0x538] sm:$0xff]
    %v407 = vld [vmem:[#allocation5 + $0x540] sm:$0xff]
    %v408 = vld [vmem:[#allocation5 + $0x548] sm:$0xff]
    %v409 = vld [vmem:[#allocation5 + $0x550] sm:$0xff]
    %v410 = vld [vmem:[#allocation5 + $0x558] sm:$0xff]
    %v411 = vld [vmem:[#allocation5 + $0x560] sm:$0xff]
    %v412 = vld [vmem:[#allocation5 + $0x568] sm:$0xff]
    %v413 = vld [vmem:[#allocation5 + $0x570] sm:$0xff]
    %v414 = vld [vmem:[#allocation5 + $0x578] sm:$0xff]
    %v415 = vld [vmem:[#allocation5 + $0x580] sm:$0xff]
    %v416 = vld [vmem:[#allocation5 + $0x588] sm:$0xff]
    %v417 = vld [vmem:[#allocation5 + $0x590] sm:$0xff]
    %v418 = vld [vmem:[#allocation5 + $0x598] sm:$0xff]
    %v419 = vld [vmem:[#allocation5 + $0x5a0] sm:$0xff]
    %v420 = vld [vmem:[#allocation5 + $0x5a8] sm:$0xff]
    %v421 = vld [vmem:[#allocation5 + $0x5b0] sm:$0xff]
    %v422 = vld [vmem:[#allocation5 + $0x5b8] sm:$0xff]
    %v423 = vld [vmem:[#allocation5 + $0x5c0] sm:$0xff]
    %v424 = vld [vmem:[#allocation5 + $0x5c8] sm:$0xff]
    %v425 = vld [vmem:[#allocation5 + $0x5d0] sm:$0xff]
    %v426 = vld [vmem:[#allocation5 + $0x5d8] sm:$0xff]
    %v427 = vld [vmem:[#allocation5 + $0x5e0] sm:$0xff]
    %v428 = vld [vmem:[#allocation5 + $0x5e8] sm:$0xff]
    %v429 = vld [vmem:[#allocation5 + $0x5f0] sm:$0xff]
    %v430 = vld [vmem:[#allocation5 + $0x5f8] sm:$0xff]
    %v431 = vld [vmem:[#allocation5 + $0x600] sm:$0xff]
    %v432 = vld [vmem:[#allocation5 + $0x608] sm:$0xff]
    %v433 = vld [vmem:[#allocation5 + $0x610] sm:$0xff]
    %v434 = vld [vmem:[#allocation5 + $0x618] sm:$0xff]
    %v435 = vld [vmem:[#allocation5 + $0x620] sm:$0xff]
    %v436 = vld [vmem:[#allocation5 + $0x628] sm:$0xff]
    %v437 = vld [vmem:[#allocation5 + $0x630] sm:$0xff]
    %v438 = vld [vmem:[#allocation5 + $0x638] sm:$0xff]
    %v439 = vld [vmem:[#allocation5 + $0x640] sm:$0xff]
    %v440 = vld [vmem:[#allocation5 + $0x648] sm:$0xff]
    %v441 = vld [vmem:[#allocation5 + $0x650] sm:$0xff]
    %v442 = vld [vmem:[#allocation5 + $0x658] sm:$0xff]
    %v443 = vld [vmem:[#allocation5 + $0x660] sm:$0xff]
    %v444 = vld [vmem:[#allocation5 + $0x668] sm:$0xff]
    %v445 = vld [vmem:[#allocation5 + $0x670] sm:$0xff]
    %v446 = vld [vmem:[#allocation5 + $0x678] sm:$0xff]
    %v447 = vld [vmem:[#allocation5 + $0x680] sm:$0xff]
    %v448 = vld [vmem:[#allocation5 + $0x688] sm:$0xff]
    %v449 = vld [vmem:[#allocation5 + $0x690] sm:$0xff]
    %v450 = vld [vmem:[#allocation5 + $0x698] sm:$0xff]
    %v451 = vld [vmem:[#allocation5 + $0x6a0] sm:$0xff]
    %v452 = vld [vmem:[#allocation5 + $0x6a8] sm:$0xff]
    %v453 = vld [vmem:[#allocation5 + $0x6b0] sm:$0xff]
    %v454 = vld [vmem:[#allocation5 + $0x6b8] sm:$0xff]
    %v455 = vld [vmem:[#allocation5 + $0x6c0] sm:$0xff]
    %v456 = vld [vmem:[#allocation5 + $0x6c8] sm:$0xff]
    %v457 = vld [vmem:[#allocation5 + $0x6d0] sm:$0xff]
    %v458 = vld [vmem:[#allocation5 + $0x6d8] sm:$0xff]
    %v459 = vld [vmem:[#allocation5 + $0x6e0] sm:$0xff]
    %v460 = vld [vmem:[#allocation5 + $0x6e8] sm:$0xff]
    %v461 = vld [vmem:[#allocation5 + $0x6f0] sm:$0xff]
    %v462 = vld [vmem:[#allocation5 + $0x6f8] sm:$0xff]
    %v463 = vld [vmem:[#allocation5 + $0x700] sm:$0xff]
    %v464 = vld [vmem:[#allocation5 + $0x708] sm:$0xff]
    %v465 = vld [vmem:[#allocation5 + $0x710] sm:$0xff]
    %v466 = vld [vmem:[#allocation5 + $0x718] sm:$0xff]
    %v467 = vld [vmem:[#allocation5 + $0x720] sm:$0xff]
    %v468 = vld [vmem:[#allocation5 + $0x728] sm:$0xff]
    %v469 = vld [vmem:[#allocation5 + $0x730] sm:$0xff]
    %v470 = vld [vmem:[#allocation5 + $0x738] sm:$0xff]
    %v471 = vld [vmem:[#allocation5 + $0x740] sm:$0xff]
    %v472 = vld [vmem:[#allocation5 + $0x748] sm:$0xff]
    %v473 = vld [vmem:[#allocation5 + $0x750] sm:$0xff]
    %v474 = vld [vmem:[#allocation5 + $0x758] sm:$0xff]
    %v475 = vld [vmem:[#allocation5 + $0x760] sm:$0xff]
    %v476 = vld [vmem:[#allocation5 + $0x768] sm:$0xff]
    %v477 = vld [vmem:[#allocation5 + $0x770] sm:$0xff]
    %v478 = vld [vmem:[#allocation5 + $0x778] sm:$0xff]
    %v479 = vld [vmem:[#allocation5 + $0x780] sm:$0xff]
    %v480 = vld [vmem:[#allocation5 + $0x788] sm:$0xff]
    %v481 = vld [vmem:[#allocation5 + $0x790] sm:$0xff]
    %v482 = vld [vmem:[#allocation5 + $0x798] sm:$0xff]
    %v483 = vld [vmem:[#allocation5 + $0x7a0] sm:$0xff]
    %v484 = vld [vmem:[#allocation5 + $0x7a8] sm:$0xff]
    %v485 = vld [vmem:[#allocation5 + $0x7b0] sm:$0xff]
    %v486 = vld [vmem:[#allocation5 + $0x7b8] sm:$0xff]
    %v487 = vld [vmem:[#allocation5 + $0x7c0] sm:$0xff]
    %v488 = vld [vmem:[#allocation5 + $0x7c8] sm:$0xff]
    %v489 = vld [vmem:[#allocation5 + $0x7d0] sm:$0xff]
    %v490 = vld [vmem:[#allocation5 + $0x7d8] sm:$0xff]
    %v491 = vld [vmem:[#allocation5 + $0x7e0] sm:$0xff]
    %v492 = vld [vmem:[#allocation5 + $0x7e8] sm:$0xff]
    %v493 = vld [vmem:[#allocation5 + $0x7f0] sm:$0xff]
    %v494 = vld [vmem:[#allocation5 + $0x7f8] sm:$0xff]
    %v495 = vld [vmem:[#allocation5 + $0x800] sm:$0xff]
    %v496 = vld [vmem:[#allocation5 + $0x808] sm:$0xff]
    %v497 = vld [vmem:[#allocation5 + $0x810] sm:$0xff]
    %v498 = vld [vmem:[#allocation5 + $0x818] sm:$0xff]
    %v499 = vld [vmem:[#allocation5 + $0x820] sm:$0xff]
    %v500 = vld [vmem:[#allocation5 + $0x828] sm:$0xff]
    %v501 = vld [vmem:[#allocation5 + $0x830] sm:$0xff]
    %v502 = vld [vmem:[#allocation5 + $0x838] sm:$0xff]
    %v503 = vld [vmem:[#allocation5 + $0x840] sm:$0xff]
    %v504 = vld [vmem:[#allocation5 + $0x848] sm:$0xff]
    %v505 = vld [vmem:[#allocation5 + $0x850] sm:$0xff]
    %v506 = vld [vmem:[#allocation5 + $0x858] sm:$0xff]
    %v507 = vld [vmem:[#allocation5 + $0x860] sm:$0xff]
    %v508 = vld [vmem:[#allocation5 + $0x868] sm:$0xff]
    %v509 = vld [vmem:[#allocation5 + $0x870] sm:$0xff]
    %v510 = vld [vmem:[#allocation5 + $0x878] sm:$0xff]
    %v511 = vld [vmem:[#allocation5 + $0x880] sm:$0xff]
    %v512 = vld [vmem:[#allocation5 + $0x888] sm:$0xff]
    %v513 = vld [vmem:[#allocation5 + $0x890] sm:$0xff]
    %v514 = vld [vmem:[#allocation5 + $0x898] sm:$0xff]
    %v515 = vld [vmem:[#allocation5 + $0x8a0] sm:$0xff]
    %v516 = vld [vmem:[#allocation5 + $0x8a8] sm:$0xff]
    %v517 = vld [vmem:[#allocation5 + $0x8b0] sm:$0xff]
    %v518 = vld [vmem:[#allocation5 + $0x8b8] sm:$0xff]
    %v519 = vld [vmem:[#allocation5 + $0x8c0] sm:$0xff]
    %v520 = vld [vmem:[#allocation5 + $0x8c8] sm:$0xff]
    %v521 = vld [vmem:[#allocation5 + $0x8d0] sm:$0xff]
    %v522 = vld [vmem:[#allocation5 + $0x8d8] sm:$0xff]
    %v523 = vld [vmem:[#allocation5 + $0x8e0] sm:$0xff]
    %v524 = vld [vmem:[#allocation5 + $0x8e8] sm:$0xff]
    %v525 = vld [vmem:[#allocation5 + $0x8f0] sm:$0xff]
    %v526 = vld [vmem:[#allocation5 + $0x8f8] sm:$0xff]
    %v527 = vld [vmem:[#allocation5 + $0x900] sm:$0xff]
    %v528 = vld [vmem:[#allocation5 + $0x908] sm:$0xff]
    %v529 = vld [vmem:[#allocation5 + $0x910] sm:$0xff]
    %v530 = vld [vmem:[#allocation5 + $0x918] sm:$0xff]
    %v531 = vld [vmem:[#allocation5 + $0x920] sm:$0xff]
    %v532 = vld [vmem:[#allocation5 + $0x928] sm:$0xff]
    %v533 = vld [vmem:[#allocation5 + $0x930] sm:$0xff]
    %v534 = vld [vmem:[#allocation5 + $0x938] sm:$0xff]
    %v535 = vld [vmem:[#allocation5 + $0x940] sm:$0xff]
    %v536 = vld [vmem:[#allocation5 + $0x948] sm:$0xff]
    %v537 = vld [vmem:[#allocation5 + $0x950] sm:$0xff]
    %v538 = vld [vmem:[#allocation5 + $0x958] sm:$0xff]
    %v539 = vld [vmem:[#allocation5 + $0x960] sm:$0xff]
    %v540 = vld [vmem:[#allocation5 + $0x968] sm:$0xff]
    %v541 = vld [vmem:[#allocation5 + $0x970] sm:$0xff]
    %v542 = vld [vmem:[#allocation5 + $0x978] sm:$0xff]
    %v543 = vld [vmem:[#allocation5 + $0x980] sm:$0xff]
    %v544 = vld [vmem:[#allocation5 + $0x988] sm:$0xff]
    %v545 = vld [vmem:[#allocation5 + $0x990] sm:$0xff]
    %v546 = vld [vmem:[#allocation5 + $0x998] sm:$0xff]
    %v547 = vld [vmem:[#allocation5 + $0x9a0] sm:$0xff]
    %v548 = vld [vmem:[#allocation5 + $0x9a8] sm:$0xff]
    %v549 = vld [vmem:[#allocation5 + $0x9b0] sm:$0xff]
    %v550 = vld [vmem:[#allocation5 + $0x9b8] sm:$0xff]
    %v551 = vld [vmem:[#allocation5 + $0x9c0] sm:$0xff]
    %v552 = vld [vmem:[#allocation5 + $0x9c8] sm:$0xff]
    %v553 = vld [vmem:[#allocation5 + $0x9d0] sm:$0xff]
    %v554 = vld [vmem:[#allocation5 + $0x9d8] sm:$0xff]
    %v555 = vld [vmem:[#allocation5 + $0x9e0] sm:$0xff]
    %v556 = vld [vmem:[#allocation5 + $0x9e8] sm:$0xff]
    %v557 = vld [vmem:[#allocation5 + $0x9f0] sm:$0xff]
    %v558 = vld [vmem:[#allocation5 + $0x9f8] sm:$0xff]
    %v559 = vld [vmem:[#allocation5 + $0xa00] sm:$0xff]
    %v560 = vld [vmem:[#allocation5 + $0xa08] sm:$0xff]
    %v561 = vld [vmem:[#allocation5 + $0xa10] sm:$0xff]
    %v562 = vld [vmem:[#allocation5 + $0xa18] sm:$0xff]
    %v563 = vld [vmem:[#allocation5 + $0xa20] sm:$0xff]
    %v564 = vld [vmem:[#allocation5 + $0xa28] sm:$0xff]
    %v565 = vld [vmem:[#allocation5 + $0xa30] sm:$0xff]
    %v566 = vld [vmem:[#allocation5 + $0xa38] sm:$0xff]
    %v567 = vld [vmem:[#allocation5 + $0xa40] sm:$0xff]
    %v568 = vld [vmem:[#allocation5 + $0xa48] sm:$0xff]
    %v569 = vld [vmem:[#allocation5 + $0xa50] sm:$0xff]
    %v570 = vld [vmem:[#allocation5 + $0xa58] sm:$0xff]
    %v571 = vld [vmem:[#allocation5 + $0xa60] sm:$0xff]
    %v572 = vld [vmem:[#allocation5 + $0xa68] sm:$0xff]
    %v573 = vld [vmem:[#allocation5 + $0xa70] sm:$0xff]
    %v574 = vld [vmem:[#allocation5 + $0xa78] sm:$0xff]
    %v575 = vld [vmem:[#allocation5 + $0xa80] sm:$0xff]
    %v576 = vld [vmem:[#allocation5 + $0xa88] sm:$0xff]
    %v577 = vld [vmem:[#allocation5 + $0xa90] sm:$0xff]
    %v578 = vld [vmem:[#allocation5 + $0xa98] sm:$0xff]
    %v579 = vld [vmem:[#allocation5 + $0xaa0] sm:$0xff]
    %v580 = vld [vmem:[#allocation5 + $0xaa8] sm:$0xff]
    %v581 = vld [vmem:[#allocation5 + $0xab0] sm:$0xff]
    %v582 = vld [vmem:[#allocation5 + $0xab8] sm:$0xff]
    %v583 = vld [vmem:[#allocation5 + $0xac0] sm:$0xff]
    %v584 = vld [vmem:[#allocation5 + $0xac8] sm:$0xff]
    %v585 = vld [vmem:[#allocation5 + $0xad0] sm:$0xff]
    %v586 = vld [vmem:[#allocation5 + $0xad8] sm:$0xff]
    %v587 = vld [vmem:[#allocation5 + $0xae0] sm:$0xff]
    %v588 = vld [vmem:[#allocation5 + $0xae8] sm:$0xff]
    %v589 = vld [vmem:[#allocation5 + $0xaf0] sm:$0xff]
    %v590 = vld [vmem:[#allocation5 + $0xaf8] sm:$0xff]
    %v591 = vld [vmem:[#allocation5 + $0xb00] sm:$0xff]
    %v592 = vld [vmem:[#allocation5 + $0xb08] sm:$0xff]
    %v593 = vld [vmem:[#allocation5 + $0xb10] sm:$0xff]
    %v594 = vld [vmem:[#allocation5 + $0xb18] sm:$0xff]
    %v595 = vld [vmem:[#allocation5 + $0xb20] sm:$0xff]
    %v596 = vld [vmem:[#allocation5 + $0xb28] sm:$0xff]
    %v597 = vld [vmem:[#allocation5 + $0xb30] sm:$0xff]
    %v598 = vld [vmem:[#allocation5 + $0xb38] sm:$0xff]
    %v599 = vld [vmem:[#allocation5 + $0xb40] sm:$0xff]
    %v600 = vld [vmem:[#allocation5 + $0xb48] sm:$0xff]
    %v601 = vld [vmem:[#allocation5 + $0xb50] sm:$0xff]
    %v602 = vld [vmem:[#allocation5 + $0xb58] sm:$0xff]
    %v603 = vld [vmem:[#allocation5 + $0xb60] sm:$0xff]
    %v604 = vld [vmem:[#allocation5 + $0xb68] sm:$0xff]
    %v605 = vld [vmem:[#allocation5 + $0xb70] sm:$0xff]
    %v606 = vld [vmem:[#allocation5 + $0xb78] sm:$0xff]
    %v607 = vld [vmem:[#allocation5 + $0xb80] sm:$0xff]
    %v608 = vld [vmem:[#allocation5 + $0xb88] sm:$0xff]
    %v609 = vld [vmem:[#allocation5 + $0xb90] sm:$0xff]
    %v610 = vld [vmem:[#allocation5 + $0xb98] sm:$0xff]
    %v611 = vld [vmem:[#allocation5 + $0xba0] sm:$0xff]
    %v612 = vld [vmem:[#allocation5 + $0xba8] sm:$0xff]
    %v613 = vld [vmem:[#allocation5 + $0xbb0] sm:$0xff]
    %v614 = vld [vmem:[#allocation5 + $0xbb8] sm:$0xff]
    %v615 = vld [vmem:[#allocation5 + $0xbc0] sm:$0xff]
    %v616 = vld [vmem:[#allocation5 + $0xbc8] sm:$0xff]
    %v617 = vld [vmem:[#allocation5 + $0xbd0] sm:$0xff]
    %v618 = vld [vmem:[#allocation5 + $0xbd8] sm:$0xff]
    %v619 = vld [vmem:[#allocation5 + $0xbe0] sm:$0xff]
    %v620 = vld [vmem:[#allocation5 + $0xbe8] sm:$0xff]
    %v621 = vld [vmem:[#allocation5 + $0xbf0] sm:$0xff]
    %v622 = vld [vmem:[#allocation5 + $0xbf8] sm:$0xff]
    %v623 = vld [vmem:[#allocation5 + $0xc00] sm:$0xff]
    %v624 = vld [vmem:[#allocation5 + $0xc08] sm:$0xff]
    %v625 = vld [vmem:[#allocation5 + $0xc10] sm:$0xff]
    %v626 = vld [vmem:[#allocation5 + $0xc18] sm:$0xff]
    %v627 = vld [vmem:[#allocation5 + $0xc20] sm:$0xff]
    %v628 = vld [vmem:[#allocation5 + $0xc28] sm:$0xff]
    %v629 = vld [vmem:[#allocation5 + $0xc30] sm:$0xff]
    %v630 = vld [vmem:[#allocation5 + $0xc38] sm:$0xff]
    %v631 = vld [vmem:[#allocation5 + $0xc40] sm:$0xff]
    %v632 = vld [vmem:[#allocation5 + $0xc48] sm:$0xff]
    %v633 = vld [vmem:[#allocation5 + $0xc50] sm:$0xff]
    %v634 = vld [vmem:[#allocation5 + $0xc58] sm:$0xff]
    %v635 = vld [vmem:[#allocation5 + $0xc60] sm:$0xff]
    %v636 = vld [vmem:[#allocation5 + $0xc68] sm:$0xff]
    %v637 = vld [vmem:[#allocation5 + $0xc70] sm:$0xff]
    %v638 = vld [vmem:[#allocation5 + $0xc78] sm:$0xff]
    %v639 = vld [vmem:[#allocation5 + $0xc80] sm:$0xff]
    %v640 = vld [vmem:[#allocation5 + $0xc88] sm:$0xff]
    %v641 = vld [vmem:[#allocation5 + $0xc90] sm:$0xff]
    %v642 = vld [vmem:[#allocation5 + $0xc98] sm:$0xff]
    %v643 = vld [vmem:[#allocation5 + $0xca0] sm:$0xff]
    %v644 = vld [vmem:[#allocation5 + $0xca8] sm:$0xff]
    %v645 = vld [vmem:[#allocation5 + $0xcb0] sm:$0xff]
    %v646 = vld [vmem:[#allocation5 + $0xcb8] sm:$0xff]
    %v647 = vld [vmem:[#allocation5 + $0xcc0] sm:$0xff]
    %v648 = vld [vmem:[#allocation5 + $0xcc8] sm:$0xff]
    %v649 = vld [vmem:[#allocation5 + $0xcd0] sm:$0xff]
    %v650 = vld [vmem:[#allocation5 + $0xcd8] sm:$0xff]
    %v651 = vld [vmem:[#allocation5 + $0xce0] sm:$0xff]
    %v652 = vld [vmem:[#allocation5 + $0xce8] sm:$0xff]
    %v653 = vld [vmem:[#allocation5 + $0xcf0] sm:$0xff]
    %v654 = vld [vmem:[#allocation5 + $0xcf8] sm:$0xff]
    %v655 = vld [vmem:[#allocation5 + $0xd00] sm:$0xff]
    %v656 = vld [vmem:[#allocation5 + $0xd08] sm:$0xff]
    %v657 = vld [vmem:[#allocation5 + $0xd10] sm:$0xff]
    %v658 = vld [vmem:[#allocation5 + $0xd18] sm:$0xff]
    %v659 = vld [vmem:[#allocation5 + $0xd20] sm:$0xff]
    %v660 = vld [vmem:[#allocation5 + $0xd28] sm:$0xff]
    %v661 = vld [vmem:[#allocation5 + $0xd30] sm:$0xff]
    %v662 = vld [vmem:[#allocation5 + $0xd38] sm:$0xff]
    %v663 = vld [vmem:[#allocation5 + $0xd40] sm:$0xff]
    %v664 = vld [vmem:[#allocation5 + $0xd48] sm:$0xff]
    %v665 = vld [vmem:[#allocation5 + $0xd50] sm:$0xff]
    %v666 = vld [vmem:[#allocation5 + $0xd58] sm:$0xff]
    %v667 = vld [vmem:[#allocation5 + $0xd60] sm:$0xff]
    %v668 = vld [vmem:[#allocation5 + $0xd68] sm:$0xff]
    %v669 = vld [vmem:[#allocation5 + $0xd70] sm:$0xff]
    %v670 = vld [vmem:[#allocation5 + $0xd78] sm:$0xff]
    %671 = vmatprep.subr.mxu0 %v285
    %672 = vmatpush1.msra.mxu0 %v284
    %673 = vmatprep.subr.mxu0 %v282
    %674 = vmatpush1.msra.mxu0 %v281
    %675 = vmatprep.subr.mxu0 %v279
    %676 = vmatpush1.msra.mxu0 %v278
    %677 = vmatprep.subr.mxu0 %v276
    %678 = vmatpush1.msra.mxu0 %v275
    %679 = vmatprep.subr.mxu0 %v273
    %680 = vmatpush1.msra.mxu0 %v272
    %681 = vmatprep.subr.mxu0 %v270
    %682 = vmatpush1.msra.mxu0 %v269
    %683 = vmatprep.subr.mxu0 %v267
    %684 = vmatpush1.msra.mxu0 %v266
    %685 = vmatprep.subr.mxu0 %v264
    %686 = vmatpush1.msra.mxu0 %v263
    %687 = vmatprep.subr.mxu0 %v261
    %688 = vmatpush1.msra.mxu0 %v260
    %689 = vmatprep.subr.mxu0 %v258
    %690 = vmatpush1.msra.mxu0 %v257
    %691 = vmatprep.subr.mxu0 %v255
    %692 = vmatpush1.msra.mxu0 %v254
    %693 = vmatprep.subr.mxu0 %v252
    %694 = vmatpush1.msra.mxu0 %v251
    %695 = vmatprep.subr.mxu0 %v249
    %696 = vmatpush1.msra.mxu0 %v248
    %697 = vmatprep.subr.mxu0 %v246
    %698 = vmatpush1.msra.mxu0 %v245
    %699 = vmatprep.subr.mxu0 %v243
    %700 = vmatpush1.msra.mxu0 %v242
    %701 = vmatprep.subr.mxu0 %v240
    %702 = vmatpush1.msra.mxu0 %v239
    %703 = vmatprep.subr.mxu0 %v333
    %704 = vmatpush2.msra.mxu0 %v332
    %705 = vmatprep.subr.mxu0 %v330
    %706 = vmatpush2.msra.mxu0 %v329
    %707 = vmatprep.subr.mxu0 %v327
    %708 = vmatpush2.msra.mxu0 %v326
    %709 = vmatprep.subr.mxu0 %v324
    %710 = vmatpush2.msra.mxu0 %v323
    %711 = vmatprep.subr.mxu0 %v321
    %712 = vmatpush2.msra.mxu0 %v320
    %713 = vmatprep.subr.mxu0 %v318
    %714 = vmatpush2.msra.mxu0 %v317
    %715 = vmatprep.subr.mxu0 %v315
    %716 = vmatpush2.msra.mxu0 %v314
    %717 = vmatprep.subr.mxu0 %v312
    %718 = vmatpush2.msra.mxu0 %v311
    %719 = vmatprep.subr.mxu0 %v309
    %720 = vmatpush2.msra.mxu0 %v308
    %721 = vmatprep.subr.mxu0 %v306
    %722 = vmatpush2.msra.mxu0 %v305
    %723 = vmatprep.subr.mxu0 %v303
    %724 = vmatpush2.msra.mxu0 %v302
    %725 = vmatprep.subr.mxu0 %v300
    %726 = vmatpush2.msra.mxu0 %v299
    %727 = vmatprep.subr.mxu0 %v297
    %728 = vmatpush2.msra.mxu0 %v296
    %729 = vmatprep.subr.mxu0 %v294
    %730 = vmatpush2.msra.mxu0 %v293
    %731 = vmatprep.subr.mxu0 %v291
    %732 = vmatpush2.msra.mxu0 %v290
    %733 = vmatprep.subr.mxu0 %v288
    %734 = vmatpush2.msra.mxu0 %v287
    %735 = vmatprep.mubr.f32.mxu0 %v178
    %736 = vmatmul.mubr.f32.gmra.mxu0 %v177
    %v737 = vpop.f32.mrf.mxu0
    %v738 = vadd.f32 0.0, %v737
    %v739 = vpop.f32.mrf.mxu0
    %v740 = vadd.f32 0.0, %v739
    %741 = vmatprep.mubr.f32.mxu0 %v181
    %742 = vmatmul.mubr.f32.gmra.mxu0 %v180
    %v743 = vpop.f32.mrf.mxu0
    %v744 = vadd.f32 0.0, %v743
    %v745 = vpop.f32.mrf.mxu0
    %v746 = vadd.f32 0.0, %v745
    %747 = vmatprep.mubr.f32.mxu0 %v184
    %748 = vmatmul.mubr.f32.gmra.mxu0 %v183
    %v749 = vpop.f32.mrf.mxu0
    %v750 = vadd.f32 0.0, %v749
    %v751 = vpop.f32.mrf.mxu0
    %v752 = vadd.f32 0.0, %v751
    %753 = vmatprep.mubr.f32.mxu0 %v187
    %754 = vmatmul.mubr.f32.gmra.mxu0 %v186
    %v755 = vpop.f32.mrf.mxu0
    %v756 = vadd.f32 0.0, %v755
    %v757 = vpop.f32.mrf.mxu0
    %v758 = vadd.f32 0.0, %v757
    %759 = vdwg.mxu0
    %760 = vmatprep.subr.mxu0 %v381
    %761 = vmatpush1.msra.mxu0 %v380
    %762 = vmatprep.subr.mxu0 %v378
    %763 = vmatpush1.msra.mxu0 %v377
    %764 = vmatprep.subr.mxu0 %v375
    %765 = vmatpush1.msra.mxu0 %v374
    %766 = vmatprep.subr.mxu0 %v372
    %767 = vmatpush1.msra.mxu0 %v371
    %768 = vmatprep.subr.mxu0 %v369
    %769 = vmatpush1.msra.mxu0 %v368
    %770 = vmatprep.subr.mxu0 %v366
    %771 = vmatpush1.msra.mxu0 %v365
    %772 = vmatprep.subr.mxu0 %v363
    %773 = vmatpush1.msra.mxu0 %v362
    %774 = vmatprep.subr.mxu0 %v360
    %775 = vmatpush1.msra.mxu0 %v359
    %776 = vmatprep.subr.mxu0 %v357
    %777 = vmatpush1.msra.mxu0 %v356
    %778 = vmatprep.subr.mxu0 %v354
    %779 = vmatpush1.msra.mxu0 %v353
    %780 = vmatprep.subr.mxu0 %v351
    %781 = vmatpush1.msra.mxu0 %v350
    %782 = vmatprep.subr.mxu0 %v348
    %783 = vmatpush1.msra.mxu0 %v347
    %784 = vmatprep.subr.mxu0 %v345
    %785 = vmatpush1.msra.mxu0 %v344
    %786 = vmatprep.subr.mxu0 %v342
    %787 = vmatpush1.msra.mxu0 %v341
    %788 = vmatprep.subr.mxu0 %v339
    %789 = vmatpush1.msra.mxu0 %v338
    %790 = vmatprep.subr.mxu0 %v336
    %791 = vmatpush1.msra.mxu0 %v335
    %792 = vmatprep.subr.mxu0 %v429
    %793 = vmatpush2.msra.mxu0 %v428
    %794 = vmatprep.subr.mxu0 %v426
    %795 = vmatpush2.msra.mxu0 %v425
    %796 = vmatprep.subr.mxu0 %v423
    %797 = vmatpush2.msra.mxu0 %v422
    %798 = vmatprep.subr.mxu0 %v420
    %799 = vmatpush2.msra.mxu0 %v419
    %800 = vmatprep.subr.mxu0 %v417
    %801 = vmatpush2.msra.mxu0 %v416
    %802 = vmatprep.subr.mxu0 %v414
    %803 = vmatpush2.msra.mxu0 %v413
    %804 = vmatprep.subr.mxu0 %v411
    %805 = vmatpush2.msra.mxu0 %v410
    %806 = vmatprep.subr.mxu0 %v408
    %807 = vmatpush2.msra.mxu0 %v407
    %808 = vmatprep.subr.mxu0 %v405
    %809 = vmatpush2.msra.mxu0 %v404
    %810 = vmatprep.subr.mxu0 %v402
    %811 = vmatpush2.msra.mxu0 %v401
    %812 = vmatprep.subr.mxu0 %v399
    %813 = vmatpush2.msra.mxu0 %v398
    %814 = vmatprep.subr.mxu0 %v396
    %815 = vmatpush2.msra.mxu0 %v395
    %816 = vmatprep.subr.mxu0 %v393
    %817 = vmatpush2.msra.mxu0 %v392
    %818 = vmatprep.subr.mxu0 %v390
    %819 = vmatpush2.msra.mxu0 %v389
    %820 = vmatprep.subr.mxu0 %v387
    %821 = vmatpush2.msra.mxu0 %v386
    %822 = vmatprep.subr.mxu0 %v384
    %823 = vmatpush2.msra.mxu0 %v383
    %824 = vmatprep.mubr.f32.mxu0 %v52
    %825 = vmatmul.mubr.f32.gmra.mxu0 %v179
    %v826 = vpop.f32.mrf.mxu0
    %v827 = vadd.f32 %v738, %v826
    %v828 = vpop.f32.mrf.mxu0
    %v829 = vadd.f32 %v740, %v828
    %830 = vmatprep.mubr.f32.mxu0 %v55
    %831 = vmatmul.mubr.f32.gmra.mxu0 %v182
    %v832 = vpop.f32.mrf.mxu0
    %v833 = vadd.f32 %v744, %v832
    %v834 = vpop.f32.mrf.mxu0
    %v835 = vadd.f32 %v746, %v834
    %836 = vmatprep.mubr.f32.mxu0 %v58
    %837 = vmatmul.mubr.f32.gmra.mxu0 %v185
    %v838 = vpop.f32.mrf.mxu0
    %v839 = vadd.f32 %v750, %v838
    %v840 = vpop.f32.mrf.mxu0
    %v841 = vadd.f32 %v752, %v840
    %842 = vmatprep.mubr.f32.mxu0 %v61
    %843 = vmatmul.mubr.f32.gmra.mxu0 %v188
    %v844 = vpop.f32.mrf.mxu0
    %v845 = vadd.f32 %v756, %v844
    %v846 = vpop.f32.mrf.mxu0
    %v847 = vadd.f32 %v758, %v846
    %848 = vdwg.mxu0
    %849 = vmatprep.subr.mxu0 %v477
    %850 = vmatpush1.msra.mxu0 %v476
    %851 = vmatprep.subr.mxu0 %v474
    %852 = vmatpush1.msra.mxu0 %v473
    %853 = vmatprep.subr.mxu0 %v471
    %854 = vmatpush1.msra.mxu0 %v470
    %855 = vmatprep.subr.mxu0 %v468
    %856 = vmatpush1.msra.mxu0 %v467
    %857 = vmatprep.subr.mxu0 %v465
    %858 = vmatpush1.msra.mxu0 %v464
    %859 = vmatprep.subr.mxu0 %v462
    %860 = vmatpush1.msra.mxu0 %v461
    %861 = vmatprep.subr.mxu0 %v459
    %862 = vmatpush1.msra.mxu0 %v458
    %863 = vmatprep.subr.mxu0 %v456
    %864 = vmatpush1.msra.mxu0 %v455
    %865 = vmatprep.subr.mxu0 %v453
    %866 = vmatpush1.msra.mxu0 %v452
    %867 = vmatprep.subr.mxu0 %v450
    %868 = vmatpush1.msra.mxu0 %v449
    %869 = vmatprep.subr.mxu0 %v447
    %870 = vmatpush1.msra.mxu0 %v446
    %871 = vmatprep.subr.mxu0 %v444
    %872 = vmatpush1.msra.mxu0 %v443
    %873 = vmatprep.subr.mxu0 %v441
    %874 = vmatpush1.msra.mxu0 %v440
    %875 = vmatprep.subr.mxu0 %v438
    %876 = vmatpush1.msra.mxu0 %v437
    %877 = vmatprep.subr.mxu0 %v435
    %878 = vmatpush1.msra.mxu0 %v434
    %879 = vmatprep.subr.mxu0 %v432
    %880 = vmatpush1.msra.mxu0 %v431
    %881 = vmatprep.subr.mxu0 %v525
    %882 = vmatpush2.msra.mxu0 %v524
    %883 = vmatprep.subr.mxu0 %v522
    %884 = vmatpush2.msra.mxu0 %v521
    %885 = vmatprep.subr.mxu0 %v519
    %886 = vmatpush2.msra.mxu0 %v518
    %887 = vmatprep.subr.mxu0 %v516
    %888 = vmatpush2.msra.mxu0 %v515
    %889 = vmatprep.subr.mxu0 %v513
    %890 = vmatpush2.msra.mxu0 %v512
    %891 = vmatprep.subr.mxu0 %v510
    %892 = vmatpush2.msra.mxu0 %v509
    %893 = vmatprep.subr.mxu0 %v507
    %894 = vmatpush2.msra.mxu0 %v506
    %895 = vmatprep.subr.mxu0 %v504
    %896 = vmatpush2.msra.mxu0 %v503
    %897 = vmatprep.subr.mxu0 %v501
    %898 = vmatpush2.msra.mxu0 %v500
    %899 = vmatprep.subr.mxu0 %v498
    %900 = vmatpush2.msra.mxu0 %v497
    %901 = vmatprep.subr.mxu0 %v495
    %902 = vmatpush2.msra.mxu0 %v494
    %903 = vmatprep.subr.mxu0 %v492
    %904 = vmatpush2.msra.mxu0 %v491
    %905 = vmatprep.subr.mxu0 %v489
    %906 = vmatpush2.msra.mxu0 %v488
    %907 = vmatprep.subr.mxu0 %v486
    %908 = vmatpush2.msra.mxu0 %v485
    %909 = vmatprep.subr.mxu0 %v483
    %910 = vmatpush2.msra.mxu0 %v482
    %911 = vmatprep.subr.mxu0 %v480
    %912 = vmatpush2.msra.mxu0 %v479
    %913 = vmatprep.mubr.f32.mxu0 %v54
    %914 = vmatmul.mubr.f32.gmra.mxu0 %v53
    %v915 = vpop.f32.mrf.mxu0
    %v916 = vadd.f32 %v827, %v915
    %v917 = vpop.f32.mrf.mxu0
    %v918 = vadd.f32 %v829, %v917
    %919 = vmatprep.mubr.f32.mxu0 %v57
    %920 = vmatmul.mubr.f32.gmra.mxu0 %v56
    %v921 = vpop.f32.mrf.mxu0
    %v922 = vadd.f32 %v833, %v921
    %v923 = vpop.f32.mrf.mxu0
    %v924 = vadd.f32 %v835, %v923
    %925 = vmatprep.mubr.f32.mxu0 %v60
    %926 = vmatmul.mubr.f32.gmra.mxu0 %v59
    %v927 = vpop.f32.mrf.mxu0
    %v928 = vadd.f32 %v839, %v927
    %v929 = vpop.f32.mrf.mxu0
    %v930 = vadd.f32 %v841, %v929
    %931 = vmatprep.mubr.f32.mxu0 %v63
    %932 = vmatmul.mubr.f32.gmra.mxu0 %v62
    %v933 = vpop.f32.mrf.mxu0
    %v934 = vadd.f32 %v845, %v933
    %v935 = vpop.f32.mrf.mxu0
    %v936 = vadd.f32 %v847, %v935
    %937 = vdwg.mxu0
    %938 = vmatprep.subr.mxu0 %v573
    %939 = vmatpush1.msra.mxu0 %v572
    %940 = vmatprep.subr.mxu0 %v570
    %941 = vmatpush1.msra.mxu0 %v569
    %942 = vmatprep.subr.mxu0 %v567
    %943 = vmatpush1.msra.mxu0 %v566
    %944 = vmatprep.subr.mxu0 %v564
    %945 = vmatpush1.msra.mxu0 %v563
    %946 = vmatprep.subr.mxu0 %v561
    %947 = vmatpush1.msra.mxu0 %v560
    %948 = vmatprep.subr.mxu0 %v558
    %949 = vmatpush1.msra.mxu0 %v557
    %950 = vmatprep.subr.mxu0 %v555
    %951 = vmatpush1.msra.mxu0 %v554
    %952 = vmatprep.subr.mxu0 %v552
    %953 = vmatpush1.msra.mxu0 %v551
    %954 = vmatprep.subr.mxu0 %v549
    %955 = vmatpush1.msra.mxu0 %v548
    %956 = vmatprep.subr.mxu0 %v546
    %957 = vmatpush1.msra.mxu0 %v545
    %958 = vmatprep.subr.mxu0 %v543
    %959 = vmatpush1.msra.mxu0 %v542
    %960 = vmatprep.subr.mxu0 %v540
    %961 = vmatpush1.msra.mxu0 %v539
    %962 = vmatprep.subr.mxu0 %v537
    %963 = vmatpush1.msra.mxu0 %v536
    %964 = vmatprep.subr.mxu0 %v534
    %965 = vmatpush1.msra.mxu0 %v533
    %966 = vmatprep.subr.mxu0 %v531
    %967 = vmatpush1.msra.mxu0 %v530
    %968 = vmatprep.subr.mxu0 %v528
    %969 = vmatpush1.msra.mxu0 %v527
    %970 = vmatprep.subr.mxu0 %v621
    %971 = vmatpush2.msra.mxu0 %v620
    %972 = vmatprep.subr.mxu0 %v618
    %973 = vmatpush2.msra.mxu0 %v617
    %974 = vmatprep.subr.mxu0 %v615
    %975 = vmatpush2.msra.mxu0 %v614
    %976 = vmatprep.subr.mxu0 %v612
    %977 = vmatpush2.msra.mxu0 %v611
    %978 = vmatprep.subr.mxu0 %v609
    %979 = vmatpush2.msra.mxu0 %v608
    %980 = vmatprep.subr.mxu0 %v606
    %981 = vmatpush2.msra.mxu0 %v605
    %982 = vmatprep.subr.mxu0 %v603
    %983 = vmatpush2.msra.mxu0 %v602
    %984 = vmatprep.subr.mxu0 %v600
    %985 = vmatpush2.msra.mxu0 %v599
    %986 = vmatprep.subr.mxu0 %v597
    %987 = vmatpush2.msra.mxu0 %v596
    %988 = vmatprep.subr.mxu0 %v594
    %989 = vmatpush2.msra.mxu0 %v593
    %990 = vmatprep.subr.mxu0 %v591
    %991 = vmatpush2.msra.mxu0 %v590
    %992 = vmatprep.subr.mxu0 %v588
    %993 = vmatpush2.msra.mxu0 %v587
    %994 = vmatprep.subr.mxu0 %v585
    %995 = vmatpush2.msra.mxu0 %v584
    %996 = vmatprep.subr.mxu0 %v582
    %997 = vmatpush2.msra.mxu0 %v581
    %998 = vmatprep.subr.mxu0 %v579
    %999 = vmatpush2.msra.mxu0 %v578
    %1000 = vmatprep.subr.mxu0 %v576
    %1001 = vmatpush2.msra.mxu0 %v575
    %1002 = vmatprep.mubr.f32.mxu0 %v228
    %1003 = vmatmul.mubr.f32.gmra.mxu0 %v227
    %v1004 = vpop.f32.mrf.mxu0
    %v1005 = vadd.f32 %v916, %v1004
    %v1006 = vpop.f32.mrf.mxu0
    %v1007 = vadd.f32 %v918, %v1006
    %1008 = vmatprep.mubr.f32.mxu0 %v231
    %1009 = vmatmul.mubr.f32.gmra.mxu0 %v230
    %v1010 = vpop.f32.mrf.mxu0
    %v1011 = vadd.f32 %v922, %v1010
    %v1012 = vpop.f32.mrf.mxu0
    %v1013 = vadd.f32 %v924, %v1012
    %1014 = vmatprep.mubr.f32.mxu0 %v234
    %1015 = vmatmul.mubr.f32.gmra.mxu0 %v233
    %v1016 = vpop.f32.mrf.mxu0
    %v1017 = vadd.f32 %v928, %v1016
    %v1018 = vpop.f32.mrf.mxu0
    %v1019 = vadd.f32 %v930, %v1018
    %1020 = vmatprep.mubr.f32.mxu0 %v237
    %1021 = vmatmul.mubr.f32.gmra.mxu0 %v236
    %v1022 = vpop.f32.mrf.mxu0
    %v1023 = vadd.f32 %v934, %v1022
    %v1024 = vpop.f32.mrf.mxu0
    %v1025 = vadd.f32 %v936, %v1024
    %1026 = vdwg.mxu0
    %1027 = vmatprep.subr.mxu0 %v669
    %1028 = vmatpush1.msra.mxu0 %v668
    %1029 = vmatprep.subr.mxu0 %v666
    %1030 = vmatpush1.msra.mxu0 %v665
    %1031 = vmatprep.subr.mxu0 %v663
    %1032 = vmatpush1.msra.mxu0 %v662
    %1033 = vmatprep.subr.mxu0 %v660
    %1034 = vmatpush1.msra.mxu0 %v659
    %1035 = vmatprep.subr.mxu0 %v657
    %1036 = vmatpush1.msra.mxu0 %v656
    %1037 = vmatprep.subr.mxu0 %v654
    %1038 = vmatpush1.msra.mxu0 %v653
    %1039 = vmatprep.subr.mxu0 %v651
    %1040 = vmatpush1.msra.mxu0 %v650
    %1041 = vmatprep.subr.mxu0 %v648
    %1042 = vmatpush1.msra.mxu0 %v647
    %1043 = vmatprep.subr.mxu0 %v645
    %1044 = vmatpush1.msra.mxu0 %v644
    %1045 = vmatprep.subr.mxu0 %v642
    %1046 = vmatpush1.msra.mxu0 %v641
    %1047 = vmatprep.subr.mxu0 %v639
    %1048 = vmatpush1.msra.mxu0 %v638
    %1049 = vmatprep.subr.mxu0 %v636
    %1050 = vmatpush1.msra.mxu0 %v635
    %1051 = vmatprep.subr.mxu0 %v633
    %1052 = vmatpush1.msra.mxu0 %v632
    %1053 = vmatprep.subr.mxu0 %v630
    %1054 = vmatpush1.msra.mxu0 %v629
    %1055 = vmatprep.subr.mxu0 %v627
    %1056 = vmatpush1.msra.mxu0 %v626
    %1057 = vmatprep.subr.mxu0 %v624
    %1058 = vmatpush1.msra.mxu0 %v623
    %1059 = vmatprep.subr.mxu0 0.0
    %1060 = vmatpush2.msra.mxu0 0.0
    %1061 = vmatprep.subr.mxu0 0.0
    %1062 = vmatpush2.msra.mxu0 0.0
    %1063 = vmatprep.subr.mxu0 0.0
    %1064 = vmatpush2.msra.mxu0 0.0
    %1065 = vmatprep.subr.mxu0 0.0
    %1066 = vmatpush2.msra.mxu0 0.0
    %1067 = vmatprep.subr.mxu0 0.0
    %1068 = vmatpush2.msra.mxu0 0.0
    %1069 = vmatprep.subr.mxu0 0.0
    %1070 = vmatpush2.msra.mxu0 0.0
    %1071 = vmatprep.subr.mxu0 0.0
    %1072 = vmatpush2.msra.mxu0 0.0
    %1073 = vmatprep.subr.mxu0 0.0
    %1074 = vmatpush2.msra.mxu0 0.0
    %1075 = vmatprep.subr.mxu0 0.0
    %1076 = vmatpush2.msra.mxu0 0.0
    %1077 = vmatprep.subr.mxu0 0.0
    %1078 = vmatpush2.msra.mxu0 0.0
    %1079 = vmatprep.subr.mxu0 0.0
    %1080 = vmatpush2.msra.mxu0 0.0
    %1081 = vmatprep.subr.mxu0 0.0
    %1082 = vmatpush2.msra.mxu0 0.0
    %1083 = vmatprep.subr.mxu0 0.0
    %1084 = vmatpush2.msra.mxu0 0.0
    %1085 = vmatprep.subr.mxu0 0.0
    %1086 = vmatpush2.msra.mxu0 0.0
    %1087 = vmatprep.subr.mxu0 0.0
    %1088 = vmatpush2.msra.mxu0 0.0
    %1089 = vmatprep.subr.mxu0 0.0
    %1090 = vmatpush2.msra.mxu0 0.0
    %1091 = vmatprep.mubr.f32.mxu0 0.0
    %1092 = vmatmul.mubr.f32.gmra.mxu0 %v229
    %v1093 = vpop.f32.mrf.mxu0
    %v1094 = vadd.f32 %v1005, %v1093
    %v1095 = vpop.f32.mrf.mxu0
    %v1096 = vadd.f32 %v1007, %v1095
    %1097 = vmatprep.mubr.f32.mxu0 0.0
    %1098 = vmatmul.mubr.f32.gmra.mxu0 %v232
    %v1099 = vpop.f32.mrf.mxu0
    %v1100 = vadd.f32 %v1011, %v1099
    %v1101 = vpop.f32.mrf.mxu0
    %v1102 = vadd.f32 %v1013, %v1101
    %1103 = vmatprep.mubr.f32.mxu0 0.0
    %1104 = vmatmul.mubr.f32.gmra.mxu0 %v235
    %v1105 = vpop.f32.mrf.mxu0
    %v1106 = vadd.f32 %v1017, %v1105
    %v1107 = vpop.f32.mrf.mxu0
    %v1108 = vadd.f32 %v1019, %v1107
    %1109 = vmatprep.mubr.f32.mxu0 0.0
    %1110 = vmatmul.mubr.f32.gmra.mxu0 %v238
    %v1111 = vpop.f32.mrf.mxu0
    %v1112 = vadd.f32 %v1023, %v1111
    %v1113 = vpop.f32.mrf.mxu0
    %v1114 = vadd.f32 %v1025, %v1113
    %1115 = vdwg.mxu0
    %1116 = vmatprep.subr.mxu0 0.0
    %1117 = vmatpush1.msra.mxu0 %v286
    %1118 = vmatprep.subr.mxu0 0.0
    %1119 = vmatpush1.msra.mxu0 %v283
    %1120 = vmatprep.subr.mxu0 0.0
    %1121 = vmatpush1.msra.mxu0 %v280
    %1122 = vmatprep.subr.mxu0 0.0
    %1123 = vmatpush1.msra.mxu0 %v277
    %1124 = vmatprep.subr.mxu0 0.0
    %1125 = vmatpush1.msra.mxu0 %v274
    %1126 = vmatprep.subr.mxu0 0.0
    %1127 = vmatpush1.msra.mxu0 %v271
    %1128 = vmatprep.subr.mxu0 0.0
    %1129 = vmatpush1.msra.mxu0 %v268
    %1130 = vmatprep.subr.mxu0 0.0
    %1131 = vmatpush1.msra.mxu0 %v265
    %1132 = vmatprep.subr.mxu0 0.0
    %1133 = vmatpush1.msra.mxu0 %v262
    %1134 = vmatprep.subr.mxu0 0.0
    %1135 = vmatpush1.msra.mxu0 %v259
    %1136 = vmatprep.subr.mxu0 0.0
    %1137 = vmatpush1.msra.mxu0 %v256
    %1138 = vmatprep.subr.mxu0 0.0
    %1139 = vmatpush1.msra.mxu0 %v253
    %1140 = vmatprep.subr.mxu0 0.0
    %1141 = vmatpush1.msra.mxu0 %v250
    %1142 = vmatprep.subr.mxu0 0.0
    %1143 = vmatpush1.msra.mxu0 %v247
    %1144 = vmatprep.subr.mxu0 0.0
    %1145 = vmatpush1.msra.mxu0 %v244
    %1146 = vmatprep.subr.mxu0 0.0
    %1147 = vmatpush1.msra.mxu0 %v241
    %1148 = vmatprep.subr.mxu0 0.0
    %1149 = vmatpush2.msra.mxu0 %v334
    %1150 = vmatprep.subr.mxu0 0.0
    %1151 = vmatpush2.msra.mxu0 %v331
    %1152 = vmatprep.subr.mxu0 0.0
    %1153 = vmatpush2.msra.mxu0 %v328
    %1154 = vmatprep.subr.mxu0 0.0
    %1155 = vmatpush2.msra.mxu0 %v325
    %1156 = vmatprep.subr.mxu0 0.0
    %1157 = vmatpush2.msra.mxu0 %v322
    %1158 = vmatprep.subr.mxu0 0.0
    %1159 = vmatpush2.msra.mxu0 %v319
    %1160 = vmatprep.subr.mxu0 0.0
    %1161 = vmatpush2.msra.mxu0 %v316
    %1162 = vmatprep.subr.mxu0 0.0
    %1163 = vmatpush2.msra.mxu0 %v313
    %1164 = vmatprep.subr.mxu0 0.0
    %1165 = vmatpush2.msra.mxu0 %v310
    %1166 = vmatprep.subr.mxu0 0.0
    %1167 = vmatpush2.msra.mxu0 %v307
    %1168 = vmatprep.subr.mxu0 0.0
    %1169 = vmatpush2.msra.mxu0 %v304
    %1170 = vmatprep.subr.mxu0 0.0
    %1171 = vmatpush2.msra.mxu0 %v301
    %1172 = vmatprep.subr.mxu0 0.0
    %1173 = vmatpush2.msra.mxu0 %v298
    %1174 = vmatprep.subr.mxu0 0.0
    %1175 = vmatpush2.msra.mxu0 %v295
    %1176 = vmatprep.subr.mxu0 0.0
    %1177 = vmatpush2.msra.mxu0 %v292
    %1178 = vmatprep.subr.mxu0 0.0
    %1179 = vmatpush2.msra.mxu0 %v289
    %1180 = vmatprep.mubr.f32.mxu0 %v178
    %1181 = vmatmul.mubr.f32.gmra.mxu0 %v177
    %v1182 = vpop.f32.mrf.mxu0
    %v1183 = vadd.f32 0.0, %v1182
    %v1184 = vpop.f32.mrf.mxu0
    %1185 = vmatprep.mubr.f32.mxu0 %v181
    %1186 = vmatmul.mubr.f32.gmra.mxu0 %v180
    %v1187 = vpop.f32.mrf.mxu0
    %v1188 = vadd.f32 0.0, %v1187
    %v1189 = vpop.f32.mrf.mxu0
    %1190 = vmatprep.mubr.f32.mxu0 %v184
    %1191 = vmatmul.mubr.f32.gmra.mxu0 %v183
    %v1192 = vpop.f32.mrf.mxu0
    %v1193 = vadd.f32 0.0, %v1192
    %v1194 = vpop.f32.mrf.mxu0
    %1195 = vmatprep.mubr.f32.mxu0 %v187
    %1196 = vmatmul.mubr.f32.gmra.mxu0 %v186
    %v1197 = vpop.f32.mrf.mxu0
    %v1198 = vadd.f32 0.0, %v1197
    %v1199 = vpop.f32.mrf.mxu0
    %1200 = vdwg.mxu0
    %1201 = vmatprep.subr.mxu0 0.0
    %1202 = vmatpush1.msra.mxu0 %v382
    %1203 = vmatprep.subr.mxu0 0.0
    %1204 = vmatpush1.msra.mxu0 %v379
    %1205 = vmatprep.subr.mxu0 0.0
    %1206 = vmatpush1.msra.mxu0 %v376
    %1207 = vmatprep.subr.mxu0 0.0
    %1208 = vmatpush1.msra.mxu0 %v373
    %1209 = vmatprep.subr.mxu0 0.0
    %1210 = vmatpush1.msra.mxu0 %v370
    %1211 = vmatprep.subr.mxu0 0.0
    %1212 = vmatpush1.msra.mxu0 %v367
    %1213 = vmatprep.subr.mxu0 0.0
    %1214 = vmatpush1.msra.mxu0 %v364
    %1215 = vmatprep.subr.mxu0 0.0
    %1216 = vmatpush1.msra.mxu0 %v361
    %1217 = vmatprep.subr.mxu0 0.0
    %1218 = vmatpush1.msra.mxu0 %v358
    %1219 = vmatprep.subr.mxu0 0.0
    %1220 = vmatpush1.msra.mxu0 %v355
    %1221 = vmatprep.subr.mxu0 0.0
    %1222 = vmatpush1.msra.mxu0 %v352
    %1223 = vmatprep.subr.mxu0 0.0
    %1224 = vmatpush1.msra.mxu0 %v349
    %1225 = vmatprep.subr.mxu0 0.0
    %1226 = vmatpush1.msra.mxu0 %v346
    %1227 = vmatprep.subr.mxu0 0.0
    %1228 = vmatpush1.msra.mxu0 %v343
    %1229 = vmatprep.subr.mxu0 0.0
    %1230 = vmatpush1.msra.mxu0 %v340
    %1231 = vmatprep.subr.mxu0 0.0
    %1232 = vmatpush1.msra.mxu0 %v337
    %1233 = vmatprep.subr.mxu0 0.0
    %1234 = vmatpush2.msra.mxu0 %v430
    %1235 = vmatprep.subr.mxu0 0.0
    %1236 = vmatpush2.msra.mxu0 %v427
    %1237 = vmatprep.subr.mxu0 0.0
    %1238 = vmatpush2.msra.mxu0 %v424
    %1239 = vmatprep.subr.mxu0 0.0
    %1240 = vmatpush2.msra.mxu0 %v421
    %1241 = vmatprep.subr.mxu0 0.0
    %1242 = vmatpush2.msra.mxu0 %v418
    %1243 = vmatprep.subr.mxu0 0.0
    %1244 = vmatpush2.msra.mxu0 %v415
    %1245 = vmatprep.subr.mxu0 0.0
    %1246 = vmatpush2.msra.mxu0 %v412
    %1247 = vmatprep.subr.mxu0 0.0
    %1248 = vmatpush2.msra.mxu0 %v409
    %1249 = vmatprep.subr.mxu0 0.0
    %1250 = vmatpush2.msra.mxu0 %v406
    %1251 = vmatprep.subr.mxu0 0.0
    %1252 = vmatpush2.msra.mxu0 %v403
    %1253 = vmatprep.subr.mxu0 0.0
    %1254 = vmatpush2.msra.mxu0 %v400
    %1255 = vmatprep.subr.mxu0 0.0
    %1256 = vmatpush2.msra.mxu0 %v397
    %1257 = vmatprep.subr.mxu0 0.0
    %1258 = vmatpush2.msra.mxu0 %v394
    %1259 = vmatprep.subr.mxu0 0.0
    %1260 = vmatpush2.msra.mxu0 %v391
    %1261 = vmatprep.subr.mxu0 0.0
    %1262 = vmatpush2.msra.mxu0 %v388
    %1263 = vmatprep.subr.mxu0 0.0
    %1264 = vmatpush2.msra.mxu0 %v385
    %1265 = vmatprep.mubr.f32.mxu0 %v52
    %1266 = vmatmul.mubr.f32.gmra.mxu0 %v179
    %v1267 = vpop.f32.mrf.mxu0
    %v1268 = vadd.f32 %v1183, %v1267
    %v1269 = vpop.f32.mrf.mxu0
    %1270 = vmatprep.mubr.f32.mxu0 %v55
    %1271 = vmatmul.mubr.f32.gmra.mxu0 %v182
    %v1272 = vpop.f32.mrf.mxu0
    %v1273 = vadd.f32 %v1188, %v1272
    %v1274 = vpop.f32.mrf.mxu0
    %1275 = vmatprep.mubr.f32.mxu0 %v58
    %1276 = vmatmul.mubr.f32.gmra.mxu0 %v185
    %v1277 = vpop.f32.mrf.mxu0
    %v1278 = vadd.f32 %v1193, %v1277
    %v1279 = vpop.f32.mrf.mxu0
    %1280 = vmatprep.mubr.f32.mxu0 %v61
    %1281 = vmatmul.mubr.f32.gmra.mxu0 %v188
    %v1282 = vpop.f32.mrf.mxu0
    %v1283 = vadd.f32 %v1198, %v1282
    %v1284 = vpop.f32.mrf.mxu0
    %1285 = vdwg.mxu0
    %1286 = vmatprep.subr.mxu0 0.0
    %1287 = vmatpush1.msra.mxu0 %v478
    %1288 = vmatprep.subr.mxu0 0.0
    %1289 = vmatpush1.msra.mxu0 %v475
    %1290 = vmatprep.subr.mxu0 0.0
    %1291 = vmatpush1.msra.mxu0 %v472
    %1292 = vmatprep.subr.mxu0 0.0
    %1293 = vmatpush1.msra.mxu0 %v469
    %1294 = vmatprep.subr.mxu0 0.0
    %1295 = vmatpush1.msra.mxu0 %v466
    %1296 = vmatprep.subr.mxu0 0.0
    %1297 = vmatpush1.msra.mxu0 %v463
    %1298 = vmatprep.subr.mxu0 0.0
    %1299 = vmatpush1.msra.mxu0 %v460
    %1300 = vmatprep.subr.mxu0 0.0
    %1301 = vmatpush1.msra.mxu0 %v457
    %1302 = vmatprep.subr.mxu0 0.0
    %1303 = vmatpush1.msra.mxu0 %v454
    %1304 = vmatprep.subr.mxu0 0.0
    %1305 = vmatpush1.msra.mxu0 %v451
    %1306 = vmatprep.subr.mxu0 0.0
    %1307 = vmatpush1.msra.mxu0 %v448
    %1308 = vmatprep.subr.mxu0 0.0
    %1309 = vmatpush1.msra.mxu0 %v445
    %1310 = vmatprep.subr.mxu0 0.0
    %1311 = vmatpush1.msra.mxu0 %v442
    %1312 = vmatprep.subr.mxu0 0.0
    %1313 = vmatpush1.msra.mxu0 %v439
    %1314 = vmatprep.subr.mxu0 0.0
    %1315 = vmatpush1.msra.mxu0 %v436
    %1316 = vmatprep.subr.mxu0 0.0
    %1317 = vmatpush1.msra.mxu0 %v433
    %1318 = vmatprep.subr.mxu0 0.0
    %1319 = vmatpush2.msra.mxu0 %v526
    %1320 = vmatprep.subr.mxu0 0.0
    %1321 = vmatpush2.msra.mxu0 %v523
    %1322 = vmatprep.subr.mxu0 0.0
    %1323 = vmatpush2.msra.mxu0 %v520
    %1324 = vmatprep.subr.mxu0 0.0
    %1325 = vmatpush2.msra.mxu0 %v517
    %1326 = vmatprep.subr.mxu0 0.0
    %1327 = vmatpush2.msra.mxu0 %v514
    %1328 = vmatprep.subr.mxu0 0.0
    %1329 = vmatpush2.msra.mxu0 %v511
    %1330 = vmatprep.subr.mxu0 0.0
    %1331 = vmatpush2.msra.mxu0 %v508
    %1332 = vmatprep.subr.mxu0 0.0
    %1333 = vmatpush2.msra.mxu0 %v505
    %1334 = vmatprep.subr.mxu0 0.0
    %1335 = vmatpush2.msra.mxu0 %v502
    %1336 = vmatprep.subr.mxu0 0.0
    %1337 = vmatpush2.msra.mxu0 %v499
    %1338 = vmatprep.subr.mxu0 0.0
    %1339 = vmatpush2.msra.mxu0 %v496
    %1340 = vmatprep.subr.mxu0 0.0
    %1341 = vmatpush2.msra.mxu0 %v493
    %1342 = vmatprep.subr.mxu0 0.0
    %1343 = vmatpush2.msra.mxu0 %v490
    %1344 = vmatprep.subr.mxu0 0.0
    %1345 = vmatpush2.msra.mxu0 %v487
    %1346 = vmatprep.subr.mxu0 0.0
    %1347 = vmatpush2.msra.mxu0 %v484
    %1348 = vmatprep.subr.mxu0 0.0
    %1349 = vmatpush2.msra.mxu0 %v481
    %1350 = vmatprep.mubr.f32.mxu0 %v54
    %1351 = vmatmul.mubr.f32.gmra.mxu0 %v53
    %v1352 = vpop.f32.mrf.mxu0
    %v1353 = vadd.f32 %v1268, %v1352
    %v1354 = vpop.f32.mrf.mxu0
    %1355 = vmatprep.mubr.f32.mxu0 %v57
    %1356 = vmatmul.mubr.f32.gmra.mxu0 %v56
    %v1357 = vpop.f32.mrf.mxu0
    %v1358 = vadd.f32 %v1273, %v1357
    %v1359 = vpop.f32.mrf.mxu0
    %1360 = vmatprep.mubr.f32.mxu0 %v60
    %1361 = vmatmul.mubr.f32.gmra.mxu0 %v59
    %v1362 = vpop.f32.mrf.mxu0
    %v1363 = vadd.f32 %v1278, %v1362
    %v1364 = vpop.f32.mrf.mxu0
    %1365 = vmatprep.mubr.f32.mxu0 %v63
    %1366 = vmatmul.mubr.f32.gmra.mxu0 %v62
    %v1367 = vpop.f32.mrf.mxu0
    %v1368 = vadd.f32 %v1283, %v1367
    %v1369 = vpop.f32.mrf.mxu0
    %1370 = vdwg.mxu0
    %1371 = vmatprep.subr.mxu0 0.0
    %1372 = vmatpush1.msra.mxu0 %v574
    %1373 = vmatprep.subr.mxu0 0.0
    %1374 = vmatpush1.msra.mxu0 %v571
    %1375 = vmatprep.subr.mxu0 0.0
    %1376 = vmatpush1.msra.mxu0 %v568
    %1377 = vmatprep.subr.mxu0 0.0
    %1378 = vmatpush1.msra.mxu0 %v565
    %1379 = vmatprep.subr.mxu0 0.0
    %1380 = vmatpush1.msra.mxu0 %v562
    %1381 = vmatprep.subr.mxu0 0.0
    %1382 = vmatpush1.msra.mxu0 %v559
    %1383 = vmatprep.subr.mxu0 0.0
    %1384 = vmatpush1.msra.mxu0 %v556
    %1385 = vmatprep.subr.mxu0 0.0
    %1386 = vmatpush1.msra.mxu0 %v553
    %1387 = vmatprep.subr.mxu0 0.0
    %1388 = vmatpush1.msra.mxu0 %v550
    %1389 = vmatprep.subr.mxu0 0.0
    %1390 = vmatpush1.msra.mxu0 %v547
    %1391 = vmatprep.subr.mxu0 0.0
    %1392 = vmatpush1.msra.mxu0 %v544
    %1393 = vmatprep.subr.mxu0 0.0
    %1394 = vmatpush1.msra.mxu0 %v541
    %1395 = vmatprep.subr.mxu0 0.0
    %1396 = vmatpush1.msra.mxu0 %v538
    %1397 = vmatprep.subr.mxu0 0.0
    %1398 = vmatpush1.msra.mxu0 %v535
    %1399 = vmatprep.subr.mxu0 0.0
    %1400 = vmatpush1.msra.mxu0 %v532
    %1401 = vmatprep.subr.mxu0 0.0
    %1402 = vmatpush1.msra.mxu0 %v529
    %1403 = vmatprep.subr.mxu0 0.0
    %1404 = vmatpush2.msra.mxu0 %v622
    %1405 = vmatprep.subr.mxu0 0.0
    %1406 = vmatpush2.msra.mxu0 %v619
    %1407 = vmatprep.subr.mxu0 0.0
    %1408 = vmatpush2.msra.mxu0 %v616
    %1409 = vmatprep.subr.mxu0 0.0
    %1410 = vmatpush2.msra.mxu0 %v613
    %1411 = vmatprep.subr.mxu0 0.0
    %1412 = vmatpush2.msra.mxu0 %v610
    %1413 = vmatprep.subr.mxu0 0.0
    %1414 = vmatpush2.msra.mxu0 %v607
    %1415 = vmatprep.subr.mxu0 0.0
    %1416 = vmatpush2.msra.mxu0 %v604
    %1417 = vmatprep.subr.mxu0 0.0
    %1418 = vmatpush2.msra.mxu0 %v601
    %1419 = vmatprep.subr.mxu0 0.0
    %1420 = vmatpush2.msra.mxu0 %v598
    %1421 = vmatprep.subr.mxu0 0.0
    %1422 = vmatpush2.msra.mxu0 %v595
    %1423 = vmatprep.subr.mxu0 0.0
    %1424 = vmatpush2.msra.mxu0 %v592
    %1425 = vmatprep.subr.mxu0 0.0
    %1426 = vmatpush2.msra.mxu0 %v589
    %1427 = vmatprep.subr.mxu0 0.0
    %1428 = vmatpush2.msra.mxu0 %v586
    %1429 = vmatprep.subr.mxu0 0.0
    %1430 = vmatpush2.msra.mxu0 %v583
    %1431 = vmatprep.subr.mxu0 0.0
    %1432 = vmatpush2.msra.mxu0 %v580
    %1433 = vmatprep.subr.mxu0 0.0
    %1434 = vmatpush2.msra.mxu0 %v577
    %1435 = vmatprep.mubr.f32.mxu0 %v228
    %1436 = vmatmul.mubr.f32.gmra.mxu0 %v227
    %v1437 = vpop.f32.mrf.mxu0
    %v1438 = vadd.f32 %v1353, %v1437
    %v1439 = vpop.f32.mrf.mxu0
    %1440 = vmatprep.mubr.f32.mxu0 %v231
    %1441 = vmatmul.mubr.f32.gmra.mxu0 %v230
    %v1442 = vpop.f32.mrf.mxu0
    %v1443 = vadd.f32 %v1358, %v1442
    %v1444 = vpop.f32.mrf.mxu0
    %1445 = vmatprep.mubr.f32.mxu0 %v234
    %1446 = vmatmul.mubr.f32.gmra.mxu0 %v233
    %v1447 = vpop.f32.mrf.mxu0
    %v1448 = vadd.f32 %v1363, %v1447
    %v1449 = vpop.f32.mrf.mxu0
    %1450 = vmatprep.mubr.f32.mxu0 %v237
    %1451 = vmatmul.mubr.f32.gmra.mxu0 %v236
    %v1452 = vpop.f32.mrf.mxu0
    %v1453 = vadd.f32 %v1368, %v1452
    %v1454 = vpop.f32.mrf.mxu0
    %1455 = vdwg.mxu0
    %1456 = vmatprep.subr.mxu0 0.0
    %1457 = vmatpush1.msra.mxu0 %v670
    %1458 = vmatprep.subr.mxu0 0.0
    %1459 = vmatpush1.msra.mxu0 %v667
    %1460 = vmatprep.subr.mxu0 0.0
    %1461 = vmatpush1.msra.mxu0 %v664
    %1462 = vmatprep.subr.mxu0 0.0
    %1463 = vmatpush1.msra.mxu0 %v661
    %1464 = vmatprep.subr.mxu0 0.0
    %1465 = vmatpush1.msra.mxu0 %v658
    %1466 = vmatprep.subr.mxu0 0.0
    %1467 = vmatpush1.msra.mxu0 %v655
    %1468 = vmatprep.subr.mxu0 0.0
    %1469 = vmatpush1.msra.mxu0 %v652
    %1470 = vmatprep.subr.mxu0 0.0
    %1471 = vmatpush1.msra.mxu0 %v649
    %1472 = vmatprep.subr.mxu0 0.0
    %1473 = vmatpush1.msra.mxu0 %v646
    %1474 = vmatprep.subr.mxu0 0.0
    %1475 = vmatpush1.msra.mxu0 %v643
    %1476 = vmatprep.subr.mxu0 0.0
    %1477 = vmatpush1.msra.mxu0 %v640
    %1478 = vmatprep.subr.mxu0 0.0
    %1479 = vmatpush1.msra.mxu0 %v637
    %1480 = vmatprep.subr.mxu0 0.0
    %1481 = vmatpush1.msra.mxu0 %v634
    %1482 = vmatprep.subr.mxu0 0.0
    %1483 = vmatpush1.msra.mxu0 %v631
    %1484 = vmatprep.subr.mxu0 0.0
    %1485 = vmatpush1.msra.mxu0 %v628
    %1486 = vmatprep.subr.mxu0 0.0
    %1487 = vmatpush1.msra.mxu0 %v625
    %1488 = vmatprep.subr.mxu0 0.0
    %1489 = vmatpush2.msra.mxu0 0.0
    %1490 = vmatprep.subr.mxu0 0.0
    %1491 = vmatpush2.msra.mxu0 0.0
    %1492 = vmatprep.subr.mxu0 0.0
    %1493 = vmatpush2.msra.mxu0 0.0
    %1494 = vmatprep.subr.mxu0 0.0
    %1495 = vmatpush2.msra.mxu0 0.0
    %1496 = vmatprep.subr.mxu0 0.0
    %1497 = vmatpush2.msra.mxu0 0.0
    %1498 = vmatprep.subr.mxu0 0.0
    %1499 = vmatpush2.msra.mxu0 0.0
    %1500 = vmatprep.subr.mxu0 0.0
    %1501 = vmatpush2.msra.mxu0 0.0
    %1502 = vmatprep.subr.mxu0 0.0
    %1503 = vmatpush2.msra.mxu0 0.0
    %1504 = vmatprep.subr.mxu0 0.0
    %1505 = vmatpush2.msra.mxu0 0.0
    %1506 = vmatprep.subr.mxu0 0.0
    %1507 = vmatpush2.msra.mxu0 0.0
    %1508 = vmatprep.subr.mxu0 0.0
    %1509 = vmatpush2.msra.mxu0 0.0
    %1510 = vmatprep.subr.mxu0 0.0
    %1511 = vmatpush2.msra.mxu0 0.0
    %1512 = vmatprep.subr.mxu0 0.0
    %1513 = vmatpush2.msra.mxu0 0.0
    %1514 = vmatprep.subr.mxu0 0.0
    %1515 = vmatpush2.msra.mxu0 0.0
    %1516 = vmatprep.subr.mxu0 0.0
    %1517 = vmatpush2.msra.mxu0 0.0
    %1518 = vmatprep.subr.mxu0 0.0
    %1519 = vmatpush2.msra.mxu0 0.0
    %1520 = vmatprep.mubr.f32.mxu0 0.0
    %1521 = vmatmul.mubr.f32.gmra.mxu0 %v229
    %v1522 = vpop.f32.mrf.mxu0
    %v1523 = vadd.f32 %v1438, %v1522
    %v1524 = vpop.f32.mrf.mxu0
    %1525 = vmatprep.mubr.f32.mxu0 0.0
    %1526 = vmatmul.mubr.f32.gmra.mxu0 %v232
    %v1527 = vpop.f32.mrf.mxu0
    %v1528 = vadd.f32 %v1443, %v1527
    %v1529 = vpop.f32.mrf.mxu0
    %1530 = vmatprep.mubr.f32.mxu0 0.0
    %1531 = vmatmul.mubr.f32.gmra.mxu0 %v235
    %v1532 = vpop.f32.mrf.mxu0
    %v1533 = vadd.f32 %v1448, %v1532
    %v1534 = vpop.f32.mrf.mxu0
    %1535 = vmatprep.mubr.f32.mxu0 0.0
    %1536 = vmatmul.mubr.f32.gmra.mxu0 %v238
    %v1537 = vpop.f32.mrf.mxu0
    %v1538 = vadd.f32 %v1453, %v1537
    %v1539 = vpop.f32.mrf.mxu0
    %1540 = vdwg.mxu0
    %1541 = vst [vmem:[#allocation7] sm:$0xff] %v1094
    %1542 = vst [vmem:[#allocation7 + $0x8] sm:$0xff] %v1096
    %1543 = vst [vmem:[#allocation7 + $0x10] sm:$0xff] %v1523
    %1544 = vst [vmem:[#allocation7 + $0x18] sm:$0xff] %v1100
    %1545 = vst [vmem:[#allocation7 + $0x20] sm:$0xff] %v1102
    %1546 = vst [vmem:[#allocation7 + $0x28] sm:$0xff] %v1528
    %1547 = vst [vmem:[#allocation7 + $0x30] sm:$0xff] %v1106
    %1548 = vst [vmem:[#allocation7 + $0x38] sm:$0xff] %v1108
    %1549 = vst [vmem:[#allocation7 + $0x40] sm:$0xff] %v1533
    %1550 = vst [vmem:[#allocation7 + $0x48] sm:$0x1] %v1112
    %1551 = vst [vmem:[#allocation7 + $0x50] sm:$0x1] %v1114
    %1552 = vst [vmem:[#allocation7 + $0x58] sm:$0x1] %v1538
    // Predicated region
    $region18: #{tpu_custom_call.1} parent=1 // pred_check
      _
    $region19: #{tpu_custom_call.1} parent=1 // pred_check_branch
      %1554 = sbr.rel (0) target = $region21
    $region20: #{tpu_custom_call.1} parent=1 // pred_region
      %s1556 = ssub.s32 1536, 1536
      %1557 = vsyncadd [#allocation4], %s1556
      %s1558 = sshll.u32 [#allocation7], 4
      %s1559 = int_to_ptr.vmem [resolvable:$true] %s1558
      %1564 = dma.vmem_to_hbm [thread:$0]  %s1559, 1536, %s2, [#allocation4], 384, 384, 24
    $region21: #{tpu_custom_call.1} parent=1 // pred_fallthru
      _
    // Predicated region
    $region22: #{tpu_custom_call.1} parent=1 // pred_check
      _
    $region23: #{tpu_custom_call.1} parent=1 // pred_check_branch
      %1566 = sbr.rel (0) target = $region25
    $region24: #{tpu_custom_call.1} parent=1 // pred_region
      %1567 = dma.done [#allocation4], 1536
    $region25: #{tpu_custom_call.1} parent=1 // pred_fallthru
      _
    %1568 = vsyncpa [#allocation3], 1
    %1569 = vsyncpa [#allocation6], 1
    %1570 = vsyncpa [#allocation4], 1

</llo_original>
